<compile_context>
chip_gen: v6e
topology: v6e:2x2x1
jax: 0.10.0
libtpu: 0.0.40
codegen_flags: <defaults>
</compile_context>

<pallas_src>
import jax
import jax.numpy as jnp
from jax.experimental import pallas as pl
from jax.experimental.pallas import tpu as pltpu


def _round_up(v, m):
    return (v + m - 1) // m * m


def linear_kernel(x_ref, w_ref, b_ref, o_ref):
    x = x_ref[...].astype(jnp.float32)        # (TN, I)
    w = w_ref[...].astype(jnp.float32)        # (TN, I, H)
    b = b_ref[...].astype(jnp.float32)        # (TN, H)
    # out[n, h] = sum_i x[n, i] * w[n, i, h]  -> lane-broadcast multiply + sublane reduce.
    acc = jnp.sum(x[:, :, None] * w, axis=1)  # (TN, H), f32
    o_ref[...] = (acc + b).astype(o_ref.dtype)


def linear_pallas(x, W, b, *, block_nodes=None):
    N, I = x.shape
    assert W.shape[0] == N and W.shape[1] == I, "W must be (N, I, H)"
    H = W.shape[2]
    assert b.shape == (N, H), "b must be (N, H)"

    # Lane-dense hidden dim (pad to a multiple of 128).
    H_p = _round_up(H, 128)

    # Node-block size: multiple of 8 sublanes, capped so one W tile stays a few MiB.
    if block_nodes is None:
        max_w_tile_bytes = 6 * 1024 * 1024
        rows_fit = max(8, (max_w_tile_bytes // max(1, I * H_p * 4)) // 8 * 8)
        block_nodes = min(_round_up(N, 8), 256, rows_fit)
    TN = _round_up(block_nodes, 8)
    N_p = _round_up(N, TN)

    f32 = jnp.float32
    x_p = jnp.zeros((N_p, I), f32).at[:N, :].set(x.astype(f32))
    W_p = jnp.zeros((N_p, I, H_p), f32).at[:N, :, :H].set(W.astype(f32))
    b_p = jnp.zeros((N_p, H_p), f32).at[:N, :H].set(b.astype(f32))

    grid = (N_p // TN,)

    # Resident footprint: double-buffered x / W / b / out tiles + slack for the
    # fused multiply-reduce temporaries. Keep well under v7x's 64 MiB physical VMEM.
    tile_bytes = 4 * (TN * I + TN * I * H_p + 2 * TN * H_p)
    vmem_bytes = int(min(48 * 2**20, max(16 * 2**20, 4 * tile_bytes + 4 * 2**20)))

    out_p = pl.pallas_call(
        linear_kernel,
        out_shape=jax.ShapeDtypeStruct((N_p, H_p), f32),
        grid_spec=pltpu.PrefetchScalarGridSpec(
            num_scalar_prefetch=0,
            grid=grid,
            in_specs=[
                pl.BlockSpec((TN, I), lambda i: (i, 0)),        # x tile
                pl.BlockSpec((TN, I, H_p), lambda i: (i, 0, 0)),  # W tile
                pl.BlockSpec((TN, H_p), lambda i: (i, 0)),      # b tile
            ],
            out_specs=pl.BlockSpec((TN, H_p), lambda i: (i, 0)),
        ),
        compiler_params=pltpu.CompilerParams(
            dimension_semantics=("parallel",),
            vmem_limit_bytes=vmem_bytes,
        ),
    )(x_p, W_p, b_p)

    return out_p[:N, :H]


def linear_ref(x, W, b):
    """Pure-JAX reference mirroring torch.bmm(x.unsqueeze(1), W).squeeze(1) + b."""
    return jnp.einsum("ni,nih->nh", x.astype(jnp.float32), W.astype(jnp.float32)) + b.astype(
        jnp.float32
    )


if __name__ == "__main__":
    key = jax.random.PRNGKey(0)

    # Primary (lane-dense) shapes: num_nodes=64, input_size=32, hidden_size=128.
    k1, k2, k3, key = jax.random.split(key, 4)
    N, I, H = 64, 32, 128
    x = jax.random.normal(k1, (N, I), dtype=jnp.float32)
    W = jax.random.normal(k2, (N, I, H), dtype=jnp.float32) * 0.1
    b = jax.random.normal(k3, (N, H), dtype=jnp.float32) * 0.1

    out = jax.block_until_ready(linear_pallas(x, W, b))
    ref = linear_ref(x, W, b)
    assert out.shape == (N, H)
    assert jnp.allclose(out, ref, atol=1e-4, rtol=1e-4), "mismatch (lane-dense case)"

    # Ragged shapes exercising the wrapper-side padding (N not /8, H not /128).
    k1, k2, k3, key = jax.random.split(key, 4)
    N2, I2, H2 = 50, 20, 96
    x2 = jax.random.normal(k1, (N2, I2), dtype=jnp.float32)
    W2 = jax.random.normal(k2, (N2, I2, H2), dtype=jnp.float32) * 0.1
    b2 = jax.random.normal(k3, (N2, H2), dtype=jnp.float32) * 0.1

    out2 = jax.block_until_ready(linear_pallas(x2, W2, b2))
    ref2 = linear_ref(x2, W2, b2)
    assert out2.shape == (N2, H2)
    assert jnp.allclose(out2, ref2, atol=1e-4, rtol=1e-4), "mismatch (padded case)"

    print("KERNEL_OK")
</pallas_src>

<mosaic_0001>
module attributes {stable_mosaic.version = 11 : i64} {
  func.func @linear_kernel(%arg0: i32, %arg1: memref<64x32xf32, #tpu.memory_space<vmem>>, %arg2: memref<64x32x128xf32, #tpu.memory_space<vmem>>, %arg3: memref<64x128xf32, #tpu.memory_space<vmem>>, %arg4: memref<64x128xf32, #tpu.memory_space<vmem>>) attributes {dimension_semantics = [#tpu.dimension_semantics<parallel>], iteration_bounds = array<i64: 1>, scalar_prefetch = 0 : i64, scratch_operands = 0 : i64, tpu.core_type = #tpu.core_type<tc>, window_params = [{transform_indices = @transform_0, window_bounds = array<i64: 64, 32>}, {transform_indices = @transform_1, window_bounds = array<i64: 64, 32, 128>}, {transform_indices = @transform_2, window_bounds = array<i64: 64, 128>}, {transform_indices = @transform_3, window_bounds = array<i64: 64, 128>}]} {
    %c0 = arith.constant 0 : index
    %c0_0 = arith.constant 0 : index
    %0 = vector.load %arg1[%c0, %c0_0] : memref<64x32xf32, #tpu.memory_space<vmem>>, vector<64x32xf32>
    %c0_1 = arith.constant 0 : index
    %c0_2 = arith.constant 0 : index
    %c0_3 = arith.constant 0 : index
    %1 = vector.load %arg2[%c0_1, %c0_2, %c0_3] : memref<64x32x128xf32, #tpu.memory_space<vmem>>, vector<64x32x128xf32>
    %c0_4 = arith.constant 0 : index
    %c0_5 = arith.constant 0 : index
    %2 = vector.load %arg3[%c0_4, %c0_5] : memref<64x128xf32, #tpu.memory_space<vmem>>, vector<64x128xf32>
    %3 = vector.shape_cast %0 : vector<64x32xf32> to vector<64x32x1xf32>
    %4 = vector.broadcast %3 : vector<64x32x1xf32> to vector<64x32x128xf32>
    %5 = arith.mulf %4, %1 : vector<64x32x128xf32>
    %cst = arith.constant dense<0.000000e+00> : vector<64x128xf32>
    %6 = vector.multi_reduction <add>, %5, %cst [1] : vector<64x32x128xf32> to vector<64x128xf32>
    %7 = arith.addf %6, %2 : vector<64x128xf32>
    %c0_6 = arith.constant 0 : index
    %c0_7 = arith.constant 0 : index
    %8 = vector.load %arg4[%c0_6, %c0_7] : memref<64x128xf32, #tpu.memory_space<vmem>>, vector<64x128xf32>
    tpu.vector_store %arg4[%c0_6, %c0_7], %7 {strides = array<i32>} : memref<64x128xf32, #tpu.memory_space<vmem>>, vector<64x128xf32>,
    return
  }
  func.func @transform_0(%arg0: i32) -> (i32, i32) {
    %c0_i32 = arith.constant 0 : i32
    %c0_i32_0 = arith.constant 0 : i32
    return %arg0, %c0_i32 : i32, i32
  }
  func.func @transform_1(%arg0: i32) -> (i32, i32, i32) {
    %c0_i32 = arith.constant 0 : i32
    %c0_i32_0 = arith.constant 0 : i32
    %c0_i32_1 = arith.constant 0 : i32
    return %arg0, %c0_i32, %c0_i32_0 : i32, i32, i32
  }
  func.func @transform_2(%arg0: i32) -> (i32, i32) {
    %c0_i32 = arith.constant 0 : i32
    %c0_i32_0 = arith.constant 0 : i32
    return %arg0, %c0_i32 : i32, i32
  }
  func.func @transform_3(%arg0: i32) -> (i32, i32) {
    %c0_i32 = arith.constant 0 : i32
    %c0_i32_0 = arith.constant 0 : i32
    return %arg0, %c0_i32 : i32, i32
  }
}

</mosaic_0001>

<llo_original>
// kernel: tpu_custom_call.1
$region0: #{tpu_custom_call.1}
  #allocation0 [shape = 'u32[]', space=smem, size = 0x4, offset = 0x4, fixed_abs, tag = 'smem constant byte address 0x4 - core index']
  #allocation1 [shape = 'u32[144,128]{1,0:T(1,128)}', space=vmem, size = 0x12000, scoped, tag = 'internal scratch']
  %s0 = inlined_call_operand.vmem [shape: f32[64,32], index: 0, kind: input, shape index: {}]
  %s1 = inlined_call_operand.hbm [shape: f32[64,32,128], index: 1, kind: input, shape index: {}]
  %s2 = inlined_call_operand.vmem [shape: f32[64,128], index: 2, kind: input, shape index: {}]
  %s3 = inlined_call_operand.hbm [shape: f32[64,128], index: 3, kind: output, shape index: {}]
  %s4 = sld [smem:[#allocation0]]
  $region26: #{tpu_custom_call.1} parent=0
    _
  %s6 = ssub.s32 1, %s4
  %s7 = scalar_select 0, %s6, %s4
  $region1: #{tpu_custom_call.1} parent=0
    #allocation2 [shape = 'u8[1048576]{0}', space=vmem, size = 0x100000, scoped, tag = 'input window, operand 1, single buffered']
    #allocation3 [shape = 's32[1]{0}', space=sflag, size = 0x4, scoped, tag = 'scoped memory for tpu_custom_call.1']
    #allocation4 [shape = 's32[1]{0}', space=sflag, size = 0x4, scoped, tag = 'scoped memory for tpu_custom_call.1']
    #allocation5 [shape = 'u8[32768]{0}', space=vmem, size = 0x8000, scoped, tag = 'output window, operand 0, single buffered']
    %8 = vsyncpa [#allocation3], 0
    %9 = vsyncpa [#allocation4], 0
    // Predicated region
    $region2: #{tpu_custom_call.1} parent=1 // pred_check
      _
    $region3: #{tpu_custom_call.1} parent=1 // pred_check_branch
      %11 = sbr.rel (0) target = $region5
    $region4: #{tpu_custom_call.1} parent=1 // pred_region
      _
    $region5: #{tpu_custom_call.1} parent=1 // pred_fallthru
      _
    // Predicated region
    $region6: #{tpu_custom_call.1} parent=1 // pred_check
      _
    $region7: #{tpu_custom_call.1} parent=1 // pred_check_branch
      %13 = sbr.rel (0) target = $region9
    $region8: #{tpu_custom_call.1} parent=1 // pred_region
      %s15 = ssub.s32 32768, 32768
      %16 = vsyncadd [#allocation3], %s15
      %s17 = sshll.u32 [#allocation2], 4
      %s18 = int_to_ptr.vmem [resolvable:$true] %s17
      %23 = dma.hbm_to_vmem [thread:$0]  %s1, 32768, %s18, [#allocation3], 128, 128, 8
    $region9: #{tpu_custom_call.1} parent=1 // pred_fallthru
      _
    // Predicated region
    $region10: #{tpu_custom_call.1} parent=1 // pred_check
      _
    $region11: #{tpu_custom_call.1} parent=1 // pred_check_branch
      %25 = sbr.rel (0) target = $region13
    $region12: #{tpu_custom_call.1} parent=1 // pred_region
      _
    $region13: #{tpu_custom_call.1} parent=1 // pred_fallthru
      _
    // Predicated region
    $region14: #{tpu_custom_call.1} parent=1 // pred_check
      _
    $region15: #{tpu_custom_call.1} parent=1 // pred_check_branch
      %27 = sbr.rel (0) target = $region17
    $region16: #{tpu_custom_call.1} parent=1 // pred_region
      %28 = dma.done [#allocation3], 32768
    $region17: #{tpu_custom_call.1} parent=1 // pred_fallthru
      _
    %v29 = vld [vmem:[%s0] sm:$0xff]
    %v30 = vld [vmem:[%s0 + $0x8] sm:$0xff]
    %v31 = vld [vmem:[%s0 + $0x10] sm:$0xff]
    %v32 = vld [vmem:[%s0 + $0x18] sm:$0xff]
    %v33 = vld [vmem:[%s0 + $0x20] sm:$0xff]
    %v34 = vld [vmem:[%s0 + $0x28] sm:$0xff]
    %v35 = vld [vmem:[%s0 + $0x30] sm:$0xff]
    %v36 = vld [vmem:[%s0 + $0x38] sm:$0xff]
    %v37 = vld [vmem:[#allocation2] sm:$0xff]
    %v38 = vld [vmem:[#allocation2 + $0x8] sm:$0xff]
    %v39 = vld [vmem:[#allocation2 + $0x10] sm:$0xff]
    %v40 = vld [vmem:[#allocation2 + $0x18] sm:$0xff]
    %v41 = vld [vmem:[#allocation2 + $0x20] sm:$0xff]
    %v42 = vld [vmem:[#allocation2 + $0x28] sm:$0xff]
    %v43 = vld [vmem:[#allocation2 + $0x30] sm:$0xff]
    %v44 = vld [vmem:[#allocation2 + $0x38] sm:$0xff]
    %v45 = vld [vmem:[#allocation2 + $0x40] sm:$0xff]
    %v46 = vld [vmem:[#allocation2 + $0x48] sm:$0xff]
    %v47 = vld [vmem:[#allocation2 + $0x50] sm:$0xff]
    %v48 = vld [vmem:[#allocation2 + $0x58] sm:$0xff]
    %v49 = vld [vmem:[#allocation2 + $0x60] sm:$0xff]
    %v50 = vld [vmem:[#allocation2 + $0x68] sm:$0xff]
    %v51 = vld [vmem:[#allocation2 + $0x70] sm:$0xff]
    %v52 = vld [vmem:[#allocation2 + $0x78] sm:$0xff]
    %v53 = vld [vmem:[#allocation2 + $0x80] sm:$0xff]
    %v54 = vld [vmem:[#allocation2 + $0x88] sm:$0xff]
    %v55 = vld [vmem:[#allocation2 + $0x90] sm:$0xff]
    %v56 = vld [vmem:[#allocation2 + $0x98] sm:$0xff]
    %v57 = vld [vmem:[#allocation2 + $0xa0] sm:$0xff]
    %v58 = vld [vmem:[#allocation2 + $0xa8] sm:$0xff]
    %v59 = vld [vmem:[#allocation2 + $0xb0] sm:$0xff]
    %v60 = vld [vmem:[#allocation2 + $0xb8] sm:$0xff]
    %v61 = vld [vmem:[#allocation2 + $0xc0] sm:$0xff]
    %v62 = vld [vmem:[#allocation2 + $0xc8] sm:$0xff]
    %v63 = vld [vmem:[#allocation2 + $0xd0] sm:$0xff]
    %v64 = vld [vmem:[#allocation2 + $0xd8] sm:$0xff]
    %v65 = vld [vmem:[#allocation2 + $0xe0] sm:$0xff]
    %v66 = vld [vmem:[#allocation2 + $0xe8] sm:$0xff]
    %v67 = vld [vmem:[#allocation2 + $0xf0] sm:$0xff]
    %v68 = vld [vmem:[#allocation2 + $0xf8] sm:$0xff]
    %v69 = vld [vmem:[#allocation2 + $0x100] sm:$0xff]
    %v70 = vld [vmem:[#allocation2 + $0x108] sm:$0xff]
    %v71 = vld [vmem:[#allocation2 + $0x110] sm:$0xff]
    %v72 = vld [vmem:[#allocation2 + $0x118] sm:$0xff]
    %v73 = vld [vmem:[#allocation2 + $0x120] sm:$0xff]
    %v74 = vld [vmem:[#allocation2 + $0x128] sm:$0xff]
    %v75 = vld [vmem:[#allocation2 + $0x130] sm:$0xff]
    %v76 = vld [vmem:[#allocation2 + $0x138] sm:$0xff]
    %v77 = vld [vmem:[#allocation2 + $0x140] sm:$0xff]
    %v78 = vld [vmem:[#allocation2 + $0x148] sm:$0xff]
    %v79 = vld [vmem:[#allocation2 + $0x150] sm:$0xff]
    %v80 = vld [vmem:[#allocation2 + $0x158] sm:$0xff]
    %v81 = vld [vmem:[#allocation2 + $0x160] sm:$0xff]
    %v82 = vld [vmem:[#allocation2 + $0x168] sm:$0xff]
    %v83 = vld [vmem:[#allocation2 + $0x170] sm:$0xff]
    %v84 = vld [vmem:[#allocation2 + $0x178] sm:$0xff]
    %v85 = vld [vmem:[#allocation2 + $0x180] sm:$0xff]
    %v86 = vld [vmem:[#allocation2 + $0x188] sm:$0xff]
    %v87 = vld [vmem:[#allocation2 + $0x190] sm:$0xff]
    %v88 = vld [vmem:[#allocation2 + $0x198] sm:$0xff]
    %v89 = vld [vmem:[#allocation2 + $0x1a0] sm:$0xff]
    %v90 = vld [vmem:[#allocation2 + $0x1a8] sm:$0xff]
    %v91 = vld [vmem:[#allocation2 + $0x1b0] sm:$0xff]
    %v92 = vld [vmem:[#allocation2 + $0x1b8] sm:$0xff]
    %v93 = vld [vmem:[#allocation2 + $0x1c0] sm:$0xff]
    %v94 = vld [vmem:[#allocation2 + $0x1c8] sm:$0xff]
    %v95 = vld [vmem:[#allocation2 + $0x1d0] sm:$0xff]
    %v96 = vld [vmem:[#allocation2 + $0x1d8] sm:$0xff]
    %v97 = vld [vmem:[#allocation2 + $0x1e0] sm:$0xff]
    %v98 = vld [vmem:[#allocation2 + $0x1e8] sm:$0xff]
    %v99 = vld [vmem:[#allocation2 + $0x1f0] sm:$0xff]
    %v100 = vld [vmem:[#allocation2 + $0x1f8] sm:$0xff]
    %v101 = vld [vmem:[#allocation2 + $0x200] sm:$0xff]
    %v102 = vld [vmem:[#allocation2 + $0x208] sm:$0xff]
    %v103 = vld [vmem:[#allocation2 + $0x210] sm:$0xff]
    %v104 = vld [vmem:[#allocation2 + $0x218] sm:$0xff]
    %v105 = vld [vmem:[#allocation2 + $0x220] sm:$0xff]
    %v106 = vld [vmem:[#allocation2 + $0x228] sm:$0xff]
    %v107 = vld [vmem:[#allocation2 + $0x230] sm:$0xff]
    %v108 = vld [vmem:[#allocation2 + $0x238] sm:$0xff]
    %v109 = vld [vmem:[#allocation2 + $0x240] sm:$0xff]
    %v110 = vld [vmem:[#allocation2 + $0x248] sm:$0xff]
    %v111 = vld [vmem:[#allocation2 + $0x250] sm:$0xff]
    %v112 = vld [vmem:[#allocation2 + $0x258] sm:$0xff]
    %v113 = vld [vmem:[#allocation2 + $0x260] sm:$0xff]
    %v114 = vld [vmem:[#allocation2 + $0x268] sm:$0xff]
    %v115 = vld [vmem:[#allocation2 + $0x270] sm:$0xff]
    %v116 = vld [vmem:[#allocation2 + $0x278] sm:$0xff]
    %v117 = vld [vmem:[#allocation2 + $0x280] sm:$0xff]
    %v118 = vld [vmem:[#allocation2 + $0x288] sm:$0xff]
    %v119 = vld [vmem:[#allocation2 + $0x290] sm:$0xff]
    %v120 = vld [vmem:[#allocation2 + $0x298] sm:$0xff]
    %v121 = vld [vmem:[#allocation2 + $0x2a0] sm:$0xff]
    %v122 = vld [vmem:[#allocation2 + $0x2a8] sm:$0xff]
    %v123 = vld [vmem:[#allocation2 + $0x2b0] sm:$0xff]
    %v124 = vld [vmem:[#allocation2 + $0x2b8] sm:$0xff]
    %v125 = vld [vmem:[#allocation2 + $0x2c0] sm:$0xff]
    %v126 = vld [vmem:[#allocation2 + $0x2c8] sm:$0xff]
    %v127 = vld [vmem:[#allocation2 + $0x2d0] sm:$0xff]
    %v128 = vld [vmem:[#allocation2 + $0x2d8] sm:$0xff]
    %v129 = vld [vmem:[#allocation2 + $0x2e0] sm:$0xff]
    %v130 = vld [vmem:[#allocation2 + $0x2e8] sm:$0xff]
    %v131 = vld [vmem:[#allocation2 + $0x2f0] sm:$0xff]
    %v132 = vld [vmem:[#allocation2 + $0x2f8] sm:$0xff]
    %v133 = vld [vmem:[#allocation2 + $0x300] sm:$0xff]
    %v134 = vld [vmem:[#allocation2 + $0x308] sm:$0xff]
    %v135 = vld [vmem:[#allocation2 + $0x310] sm:$0xff]
    %v136 = vld [vmem:[#allocation2 + $0x318] sm:$0xff]
    %v137 = vld [vmem:[#allocation2 + $0x320] sm:$0xff]
    %v138 = vld [vmem:[#allocation2 + $0x328] sm:$0xff]
    %v139 = vld [vmem:[#allocation2 + $0x330] sm:$0xff]
    %v140 = vld [vmem:[#allocation2 + $0x338] sm:$0xff]
    %v141 = vld [vmem:[#allocation2 + $0x340] sm:$0xff]
    %v142 = vld [vmem:[#allocation2 + $0x348] sm:$0xff]
    %v143 = vld [vmem:[#allocation2 + $0x350] sm:$0xff]
    %v144 = vld [vmem:[#allocation2 + $0x358] sm:$0xff]
    %v145 = vld [vmem:[#allocation2 + $0x360] sm:$0xff]
    %v146 = vld [vmem:[#allocation2 + $0x368] sm:$0xff]
    %v147 = vld [vmem:[#allocation2 + $0x370] sm:$0xff]
    %v148 = vld [vmem:[#allocation2 + $0x378] sm:$0xff]
    %v149 = vld [vmem:[#allocation2 + $0x380] sm:$0xff]
    %v150 = vld [vmem:[#allocation2 + $0x388] sm:$0xff]
    %v151 = vld [vmem:[#allocation2 + $0x390] sm:$0xff]
    %v152 = vld [vmem:[#allocation2 + $0x398] sm:$0xff]
    %v153 = vld [vmem:[#allocation2 + $0x3a0] sm:$0xff]
    %v154 = vld [vmem:[#allocation2 + $0x3a8] sm:$0xff]
    %v155 = vld [vmem:[#allocation2 + $0x3b0] sm:$0xff]
    %v156 = vld [vmem:[#allocation2 + $0x3b8] sm:$0xff]
    %v157 = vld [vmem:[#allocation2 + $0x3c0] sm:$0xff]
    %v158 = vld [vmem:[#allocation2 + $0x3c8] sm:$0xff]
    %v159 = vld [vmem:[#allocation2 + $0x3d0] sm:$0xff]
    %v160 = vld [vmem:[#allocation2 + $0x3d8] sm:$0xff]
    %v161 = vld [vmem:[#allocation2 + $0x3e0] sm:$0xff]
    %v162 = vld [vmem:[#allocation2 + $0x3e8] sm:$0xff]
    %v163 = vld [vmem:[#allocation2 + $0x3f0] sm:$0xff]
    %v164 = vld [vmem:[#allocation2 + $0x3f8] sm:$0xff]
    %v165 = vld [vmem:[#allocation2 + $0x400] sm:$0xff]
    %v166 = vld [vmem:[#allocation2 + $0x408] sm:$0xff]
    %v167 = vld [vmem:[#allocation2 + $0x410] sm:$0xff]
    %v168 = vld [vmem:[#allocation2 + $0x418] sm:$0xff]
    %v169 = vld [vmem:[#allocation2 + $0x420] sm:$0xff]
    %v170 = vld [vmem:[#allocation2 + $0x428] sm:$0xff]
    %v171 = vld [vmem:[#allocation2 + $0x430] sm:$0xff]
    %v172 = vld [vmem:[#allocation2 + $0x438] sm:$0xff]
    %v173 = vld [vmem:[#allocation2 + $0x440] sm:$0xff]
    %v174 = vld [vmem:[#allocation2 + $0x448] sm:$0xff]
    %v175 = vld [vmem:[#allocation2 + $0x450] sm:$0xff]
    %v176 = vld [vmem:[#allocation2 + $0x458] sm:$0xff]
    %v177 = vld [vmem:[#allocation2 + $0x460] sm:$0xff]
    %v178 = vld [vmem:[#allocation2 + $0x468] sm:$0xff]
    %v179 = vld [vmem:[#allocation2 + $0x470] sm:$0xff]
    %v180 = vld [vmem:[#allocation2 + $0x478] sm:$0xff]
    %v181 = vld [vmem:[#allocation2 + $0x480] sm:$0xff]
    %v182 = vld [vmem:[#allocation2 + $0x488] sm:$0xff]
    %v183 = vld [vmem:[#allocation2 + $0x490] sm:$0xff]
    %v184 = vld [vmem:[#allocation2 + $0x498] sm:$0xff]
    %v185 = vld [vmem:[#allocation2 + $0x4a0] sm:$0xff]
    %v186 = vld [vmem:[#allocation2 + $0x4a8] sm:$0xff]
    %v187 = vld [vmem:[#allocation2 + $0x4b0] sm:$0xff]
    %v188 = vld [vmem:[#allocation2 + $0x4b8] sm:$0xff]
    %v189 = vld [vmem:[#allocation2 + $0x4c0] sm:$0xff]
    %v190 = vld [vmem:[#allocation2 + $0x4c8] sm:$0xff]
    %v191 = vld [vmem:[#allocation2 + $0x4d0] sm:$0xff]
    %v192 = vld [vmem:[#allocation2 + $0x4d8] sm:$0xff]
    %v193 = vld [vmem:[#allocation2 + $0x4e0] sm:$0xff]
    %v194 = vld [vmem:[#allocation2 + $0x4e8] sm:$0xff]
    %v195 = vld [vmem:[#allocation2 + $0x4f0] sm:$0xff]
    %v196 = vld [vmem:[#allocation2 + $0x4f8] sm:$0xff]
    %v197 = vld [vmem:[#allocation2 + $0x500] sm:$0xff]
    %v198 = vld [vmem:[#allocation2 + $0x508] sm:$0xff]
    %v199 = vld [vmem:[#allocation2 + $0x510] sm:$0xff]
    %v200 = vld [vmem:[#allocation2 + $0x518] sm:$0xff]
    %v201 = vld [vmem:[#allocation2 + $0x520] sm:$0xff]
    %v202 = vld [vmem:[#allocation2 + $0x528] sm:$0xff]
    %v203 = vld [vmem:[#allocation2 + $0x530] sm:$0xff]
    %v204 = vld [vmem:[#allocation2 + $0x538] sm:$0xff]
    %v205 = vld [vmem:[#allocation2 + $0x540] sm:$0xff]
    %v206 = vld [vmem:[#allocation2 + $0x548] sm:$0xff]
    %v207 = vld [vmem:[#allocation2 + $0x550] sm:$0xff]
    %v208 = vld [vmem:[#allocation2 + $0x558] sm:$0xff]
    %v209 = vld [vmem:[#allocation2 + $0x560] sm:$0xff]
    %v210 = vld [vmem:[#allocation2 + $0x568] sm:$0xff]
    %v211 = vld [vmem:[#allocation2 + $0x570] sm:$0xff]
    %v212 = vld [vmem:[#allocation2 + $0x578] sm:$0xff]
    %v213 = vld [vmem:[#allocation2 + $0x580] sm:$0xff]
    %v214 = vld [vmem:[#allocation2 + $0x588] sm:$0xff]
    %v215 = vld [vmem:[#allocation2 + $0x590] sm:$0xff]
    %v216 = vld [vmem:[#allocation2 + $0x598] sm:$0xff]
    %v217 = vld [vmem:[#allocation2 + $0x5a0] sm:$0xff]
    %v218 = vld [vmem:[#allocation2 + $0x5a8] sm:$0xff]
    %v219 = vld [vmem:[#allocation2 + $0x5b0] sm:$0xff]
    %v220 = vld [vmem:[#allocation2 + $0x5b8] sm:$0xff]
    %v221 = vld [vmem:[#allocation2 + $0x5c0] sm:$0xff]
    %v222 = vld [vmem:[#allocation2 + $0x5c8] sm:$0xff]
    %v223 = vld [vmem:[#allocation2 + $0x5d0] sm:$0xff]
    %v224 = vld [vmem:[#allocation2 + $0x5d8] sm:$0xff]
    %v225 = vld [vmem:[#allocation2 + $0x5e0] sm:$0xff]
    %v226 = vld [vmem:[#allocation2 + $0x5e8] sm:$0xff]
    %v227 = vld [vmem:[#allocation2 + $0x5f0] sm:$0xff]
    %v228 = vld [vmem:[#allocation2 + $0x5f8] sm:$0xff]
    %v229 = vld [vmem:[#allocation2 + $0x600] sm:$0xff]
    %v230 = vld [vmem:[#allocation2 + $0x608] sm:$0xff]
    %v231 = vld [vmem:[#allocation2 + $0x610] sm:$0xff]
    %v232 = vld [vmem:[#allocation2 + $0x618] sm:$0xff]
    %v233 = vld [vmem:[#allocation2 + $0x620] sm:$0xff]
    %v234 = vld [vmem:[#allocation2 + $0x628] sm:$0xff]
    %v235 = vld [vmem:[#allocation2 + $0x630] sm:$0xff]
    %v236 = vld [vmem:[#allocation2 + $0x638] sm:$0xff]
    %v237 = vld [vmem:[#allocation2 + $0x640] sm:$0xff]
    %v238 = vld [vmem:[#allocation2 + $0x648] sm:$0xff]
    %v239 = vld [vmem:[#allocation2 + $0x650] sm:$0xff]
    %v240 = vld [vmem:[#allocation2 + $0x658] sm:$0xff]
    %v241 = vld [vmem:[#allocation2 + $0x660] sm:$0xff]
    %v242 = vld [vmem:[#allocation2 + $0x668] sm:$0xff]
    %v243 = vld [vmem:[#allocation2 + $0x670] sm:$0xff]
    %v244 = vld [vmem:[#allocation2 + $0x678] sm:$0xff]
    %v245 = vld [vmem:[#allocation2 + $0x680] sm:$0xff]
    %v246 = vld [vmem:[#allocation2 + $0x688] sm:$0xff]
    %v247 = vld [vmem:[#allocation2 + $0x690] sm:$0xff]
    %v248 = vld [vmem:[#allocation2 + $0x698] sm:$0xff]
    %v249 = vld [vmem:[#allocation2 + $0x6a0] sm:$0xff]
    %v250 = vld [vmem:[#allocation2 + $0x6a8] sm:$0xff]
    %v251 = vld [vmem:[#allocation2 + $0x6b0] sm:$0xff]
    %v252 = vld [vmem:[#allocation2 + $0x6b8] sm:$0xff]
    %v253 = vld [vmem:[#allocation2 + $0x6c0] sm:$0xff]
    %v254 = vld [vmem:[#allocation2 + $0x6c8] sm:$0xff]
    %v255 = vld [vmem:[#allocation2 + $0x6d0] sm:$0xff]
    %v256 = vld [vmem:[#allocation2 + $0x6d8] sm:$0xff]
    %v257 = vld [vmem:[#allocation2 + $0x6e0] sm:$0xff]
    %v258 = vld [vmem:[#allocation2 + $0x6e8] sm:$0xff]
    %v259 = vld [vmem:[#allocation2 + $0x6f0] sm:$0xff]
    %v260 = vld [vmem:[#allocation2 + $0x6f8] sm:$0xff]
    %v261 = vld [vmem:[#allocation2 + $0x700] sm:$0xff]
    %v262 = vld [vmem:[#allocation2 + $0x708] sm:$0xff]
    %v263 = vld [vmem:[#allocation2 + $0x710] sm:$0xff]
    %v264 = vld [vmem:[#allocation2 + $0x718] sm:$0xff]
    %v265 = vld [vmem:[#allocation2 + $0x720] sm:$0xff]
    %v266 = vld [vmem:[#allocation2 + $0x728] sm:$0xff]
    %v267 = vld [vmem:[#allocation2 + $0x730] sm:$0xff]
    %v268 = vld [vmem:[#allocation2 + $0x738] sm:$0xff]
    %v269 = vld [vmem:[#allocation2 + $0x740] sm:$0xff]
    %v270 = vld [vmem:[#allocation2 + $0x748] sm:$0xff]
    %v271 = vld [vmem:[#allocation2 + $0x750] sm:$0xff]
    %v272 = vld [vmem:[#allocation2 + $0x758] sm:$0xff]
    %v273 = vld [vmem:[#allocation2 + $0x760] sm:$0xff]
    %v274 = vld [vmem:[#allocation2 + $0x768] sm:$0xff]
    %v275 = vld [vmem:[#allocation2 + $0x770] sm:$0xff]
    %v276 = vld [vmem:[#allocation2 + $0x778] sm:$0xff]
    %v277 = vld [vmem:[#allocation2 + $0x780] sm:$0xff]
    %v278 = vld [vmem:[#allocation2 + $0x788] sm:$0xff]
    %v279 = vld [vmem:[#allocation2 + $0x790] sm:$0xff]
    %v280 = vld [vmem:[#allocation2 + $0x798] sm:$0xff]
    %v281 = vld [vmem:[#allocation2 + $0x7a0] sm:$0xff]
    %v282 = vld [vmem:[#allocation2 + $0x7a8] sm:$0xff]
    %v283 = vld [vmem:[#allocation2 + $0x7b0] sm:$0xff]
    %v284 = vld [vmem:[#allocation2 + $0x7b8] sm:$0xff]
    %v285 = vld [vmem:[#allocation2 + $0x7c0] sm:$0xff]
    %v286 = vld [vmem:[#allocation2 + $0x7c8] sm:$0xff]
    %v287 = vld [vmem:[#allocation2 + $0x7d0] sm:$0xff]
    %v288 = vld [vmem:[#allocation2 + $0x7d8] sm:$0xff]
    %v289 = vld [vmem:[#allocation2 + $0x7e0] sm:$0xff]
    %v290 = vld [vmem:[#allocation2 + $0x7e8] sm:$0xff]
    %v291 = vld [vmem:[#allocation2 + $0x7f0] sm:$0xff]
    %v292 = vld [vmem:[#allocation2 + $0x7f8] sm:$0xff]
    %v293 = vld [vmem:[%s2] sm:$0xff]
    %v294 = vld [vmem:[%s2 + $0x8] sm:$0xff]
    %v295 = vld [vmem:[%s2 + $0x10] sm:$0xff]
    %v296 = vld [vmem:[%s2 + $0x18] sm:$0xff]
    %v297 = vld [vmem:[%s2 + $0x20] sm:$0xff]
    %v298 = vld [vmem:[%s2 + $0x28] sm:$0xff]
    %v299 = vld [vmem:[%s2 + $0x30] sm:$0xff]
    %v300 = vld [vmem:[%s2 + $0x38] sm:$0xff]
    %v301 = vlaneseq
    %v302 = vshrl.u32 %v301, 7
    %v303 = vsub.s32 0, %v302
    %v304 = vrot.slane %v29, %v303
    %306 = vbcast.lane.b32.xlu0 %v304, 256
    %v307 = vpop.permute.xlu0 %306
    %s309 = sor.u32 256, 8
    %310 = vbcast.lane.b32.xlu0 %v304, %s309
    %v311 = vpop.permute.xlu0 %310
    %s313 = sor.u32 256, 16
    %314 = vbcast.lane.b32.xlu0 %v304, %s313
    %v315 = vpop.permute.xlu0 %314
    %s317 = sor.u32 256, 24
    %318 = vbcast.lane.b32.xlu0 %v304, %s317
    %v319 = vpop.permute.xlu0 %318
    %v320 = vlaneseq
    %v321 = vshrl.u32 %v320, 7
    %v322 = vsub.s32 1, %v321
    %v323 = vrot.slane %v29, %v322
    %325 = vbcast.lane.b32.xlu0 %v323, 256
    %v326 = vpop.permute.xlu0 %325
    %s328 = sor.u32 256, 8
    %329 = vbcast.lane.b32.xlu0 %v323, %s328
    %v330 = vpop.permute.xlu0 %329
    %s332 = sor.u32 256, 16
    %333 = vbcast.lane.b32.xlu0 %v323, %s332
    %v334 = vpop.permute.xlu0 %333
    %s336 = sor.u32 256, 24
    %337 = vbcast.lane.b32.xlu0 %v323, %s336
    %v338 = vpop.permute.xlu0 %337
    %v339 = vlaneseq
    %v340 = vshrl.u32 %v339, 7
    %v341 = vsub.s32 2, %v340
    %v342 = vrot.slane %v29, %v341
    %344 = vbcast.lane.b32.xlu0 %v342, 256
    %v345 = vpop.permute.xlu0 %344
    %s347 = sor.u32 256, 8
    %348 = vbcast.lane.b32.xlu0 %v342, %s347
    %v349 = vpop.permute.xlu0 %348
    %s351 = sor.u32 256, 16
    %352 = vbcast.lane.b32.xlu0 %v342, %s351
    %v353 = vpop.permute.xlu0 %352
    %s355 = sor.u32 256, 24
    %356 = vbcast.lane.b32.xlu0 %v342, %s355
    %v357 = vpop.permute.xlu0 %356
    %v358 = vlaneseq
    %v359 = vshrl.u32 %v358, 7
    %v360 = vsub.s32 3, %v359
    %v361 = vrot.slane %v29, %v360
    %363 = vbcast.lane.b32.xlu0 %v361, 256
    %v364 = vpop.permute.xlu0 %363
    %s366 = sor.u32 256, 8
    %367 = vbcast.lane.b32.xlu0 %v361, %s366
    %v368 = vpop.permute.xlu0 %367
    %s370 = sor.u32 256, 16
    %371 = vbcast.lane.b32.xlu0 %v361, %s370
    %v372 = vpop.permute.xlu0 %371
    %s374 = sor.u32 256, 24
    %375 = vbcast.lane.b32.xlu0 %v361, %s374
    %v376 = vpop.permute.xlu0 %375
    %v377 = vlaneseq
    %v378 = vshrl.u32 %v377, 7
    %v379 = vsub.s32 4, %v378
    %v380 = vrot.slane %v29, %v379
    %382 = vbcast.lane.b32.xlu0 %v380, 256
    %v383 = vpop.permute.xlu0 %382
    %s385 = sor.u32 256, 8
    %386 = vbcast.lane.b32.xlu0 %v380, %s385
    %v387 = vpop.permute.xlu0 %386
    %s389 = sor.u32 256, 16
    %390 = vbcast.lane.b32.xlu0 %v380, %s389
    %v391 = vpop.permute.xlu0 %390
    %s393 = sor.u32 256, 24
    %394 = vbcast.lane.b32.xlu0 %v380, %s393
    %v395 = vpop.permute.xlu0 %394
    %v396 = vlaneseq
    %v397 = vshrl.u32 %v396, 7
    %v398 = vsub.s32 5, %v397
    %v399 = vrot.slane %v29, %v398
    %401 = vbcast.lane.b32.xlu0 %v399, 256
    %v402 = vpop.permute.xlu0 %401
    %s404 = sor.u32 256, 8
    %405 = vbcast.lane.b32.xlu0 %v399, %s404
    %v406 = vpop.permute.xlu0 %405
    %s408 = sor.u32 256, 16
    %409 = vbcast.lane.b32.xlu0 %v399, %s408
    %v410 = vpop.permute.xlu0 %409
    %s412 = sor.u32 256, 24
    %413 = vbcast.lane.b32.xlu0 %v399, %s412
    %v414 = vpop.permute.xlu0 %413
    %v415 = vlaneseq
    %v416 = vshrl.u32 %v415, 7
    %v417 = vsub.s32 6, %v416
    %v418 = vrot.slane %v29, %v417
    %420 = vbcast.lane.b32.xlu0 %v418, 256
    %v421 = vpop.permute.xlu0 %420
    %s423 = sor.u32 256, 8
    %424 = vbcast.lane.b32.xlu0 %v418, %s423
    %v425 = vpop.permute.xlu0 %424
    %s427 = sor.u32 256, 16
    %428 = vbcast.lane.b32.xlu0 %v418, %s427
    %v429 = vpop.permute.xlu0 %428
    %s431 = sor.u32 256, 24
    %432 = vbcast.lane.b32.xlu0 %v418, %s431
    %v433 = vpop.permute.xlu0 %432
    %v434 = vlaneseq
    %v435 = vshrl.u32 %v434, 7
    %v436 = vsub.s32 7, %v435
    %v437 = vrot.slane %v29, %v436
    %439 = vbcast.lane.b32.xlu0 %v437, 256
    %v440 = vpop.permute.xlu0 %439
    %s442 = sor.u32 256, 8
    %443 = vbcast.lane.b32.xlu0 %v437, %s442
    %v444 = vpop.permute.xlu0 %443
    %s446 = sor.u32 256, 16
    %447 = vbcast.lane.b32.xlu0 %v437, %s446
    %v448 = vpop.permute.xlu0 %447
    %s450 = sor.u32 256, 24
    %451 = vbcast.lane.b32.xlu0 %v437, %s450
    %v452 = vpop.permute.xlu0 %451
    %v453 = vlaneseq
    %v454 = vshrl.u32 %v453, 7
    %v455 = vsub.s32 0, %v454
    %v456 = vrot.slane %v30, %v455
    %458 = vbcast.lane.b32.xlu0 %v456, 256
    %v459 = vpop.permute.xlu0 %458
    %s461 = sor.u32 256, 8
    %462 = vbcast.lane.b32.xlu0 %v456, %s461
    %v463 = vpop.permute.xlu0 %462
    %s465 = sor.u32 256, 16
    %466 = vbcast.lane.b32.xlu0 %v456, %s465
    %v467 = vpop.permute.xlu0 %466
    %s469 = sor.u32 256, 24
    %470 = vbcast.lane.b32.xlu0 %v456, %s469
    %v471 = vpop.permute.xlu0 %470
    %v472 = vlaneseq
    %v473 = vshrl.u32 %v472, 7
    %v474 = vsub.s32 1, %v473
    %v475 = vrot.slane %v30, %v474
    %477 = vbcast.lane.b32.xlu0 %v475, 256
    %v478 = vpop.permute.xlu0 %477
    %s480 = sor.u32 256, 8
    %481 = vbcast.lane.b32.xlu0 %v475, %s480
    %v482 = vpop.permute.xlu0 %481
    %s484 = sor.u32 256, 16
    %485 = vbcast.lane.b32.xlu0 %v475, %s484
    %v486 = vpop.permute.xlu0 %485
    %s488 = sor.u32 256, 24
    %489 = vbcast.lane.b32.xlu0 %v475, %s488
    %v490 = vpop.permute.xlu0 %489
    %v491 = vlaneseq
    %v492 = vshrl.u32 %v491, 7
    %v493 = vsub.s32 2, %v492
    %v494 = vrot.slane %v30, %v493
    %496 = vbcast.lane.b32.xlu0 %v494, 256
    %v497 = vpop.permute.xlu0 %496
    %s499 = sor.u32 256, 8
    %500 = vbcast.lane.b32.xlu0 %v494, %s499
    %v501 = vpop.permute.xlu0 %500
    %s503 = sor.u32 256, 16
    %504 = vbcast.lane.b32.xlu0 %v494, %s503
    %v505 = vpop.permute.xlu0 %504
    %s507 = sor.u32 256, 24
    %508 = vbcast.lane.b32.xlu0 %v494, %s507
    %v509 = vpop.permute.xlu0 %508
    %v510 = vlaneseq
    %v511 = vshrl.u32 %v510, 7
    %v512 = vsub.s32 3, %v511
    %v513 = vrot.slane %v30, %v512
    %515 = vbcast.lane.b32.xlu0 %v513, 256
    %v516 = vpop.permute.xlu0 %515
    %s518 = sor.u32 256, 8
    %519 = vbcast.lane.b32.xlu0 %v513, %s518
    %v520 = vpop.permute.xlu0 %519
    %s522 = sor.u32 256, 16
    %523 = vbcast.lane.b32.xlu0 %v513, %s522
    %v524 = vpop.permute.xlu0 %523
    %s526 = sor.u32 256, 24
    %527 = vbcast.lane.b32.xlu0 %v513, %s526
    %v528 = vpop.permute.xlu0 %527
    %v529 = vlaneseq
    %v530 = vshrl.u32 %v529, 7
    %v531 = vsub.s32 4, %v530
    %v532 = vrot.slane %v30, %v531
    %534 = vbcast.lane.b32.xlu0 %v532, 256
    %v535 = vpop.permute.xlu0 %534
    %s537 = sor.u32 256, 8
    %538 = vbcast.lane.b32.xlu0 %v532, %s537
    %v539 = vpop.permute.xlu0 %538
    %s541 = sor.u32 256, 16
    %542 = vbcast.lane.b32.xlu0 %v532, %s541
    %v543 = vpop.permute.xlu0 %542
    %s545 = sor.u32 256, 24
    %546 = vbcast.lane.b32.xlu0 %v532, %s545
    %v547 = vpop.permute.xlu0 %546
    %v548 = vlaneseq
    %v549 = vshrl.u32 %v548, 7
    %v550 = vsub.s32 5, %v549
    %v551 = vrot.slane %v30, %v550
    %553 = vbcast.lane.b32.xlu0 %v551, 256
    %v554 = vpop.permute.xlu0 %553
    %s556 = sor.u32 256, 8
    %557 = vbcast.lane.b32.xlu0 %v551, %s556
    %v558 = vpop.permute.xlu0 %557
    %s560 = sor.u32 256, 16
    %561 = vbcast.lane.b32.xlu0 %v551, %s560
    %v562 = vpop.permute.xlu0 %561
    %s564 = sor.u32 256, 24
    %565 = vbcast.lane.b32.xlu0 %v551, %s564
    %v566 = vpop.permute.xlu0 %565
    %v567 = vlaneseq
    %v568 = vshrl.u32 %v567, 7
    %v569 = vsub.s32 6, %v568
    %v570 = vrot.slane %v30, %v569
    %572 = vbcast.lane.b32.xlu0 %v570, 256
    %v573 = vpop.permute.xlu0 %572
    %s575 = sor.u32 256, 8
    %576 = vbcast.lane.b32.xlu0 %v570, %s575
    %v577 = vpop.permute.xlu0 %576
    %s579 = sor.u32 256, 16
    %580 = vbcast.lane.b32.xlu0 %v570, %s579
    %v581 = vpop.permute.xlu0 %580
    %s583 = sor.u32 256, 24
    %584 = vbcast.lane.b32.xlu0 %v570, %s583
    %v585 = vpop.permute.xlu0 %584
    %v586 = vlaneseq
    %v587 = vshrl.u32 %v586, 7
    %v588 = vsub.s32 7, %v587
    %v589 = vrot.slane %v30, %v588
    %591 = vbcast.lane.b32.xlu0 %v589, 256
    %v592 = vpop.permute.xlu0 %591
    %s594 = sor.u32 256, 8
    %595 = vbcast.lane.b32.xlu0 %v589, %s594
    %v596 = vpop.permute.xlu0 %595
    %s598 = sor.u32 256, 16
    %599 = vbcast.lane.b32.xlu0 %v589, %s598
    %v600 = vpop.permute.xlu0 %599
    %s602 = sor.u32 256, 24
    %603 = vbcast.lane.b32.xlu0 %v589, %s602
    %v604 = vpop.permute.xlu0 %603
    %v605 = vlaneseq
    %v606 = vshrl.u32 %v605, 7
    %v607 = vsub.s32 0, %v606
    %v608 = vrot.slane %v31, %v607
    %610 = vbcast.lane.b32.xlu0 %v608, 256
    %v611 = vpop.permute.xlu0 %610
    %s613 = sor.u32 256, 8
    %614 = vbcast.lane.b32.xlu0 %v608, %s613
    %v615 = vpop.permute.xlu0 %614
    %s617 = sor.u32 256, 16
    %618 = vbcast.lane.b32.xlu0 %v608, %s617
    %v619 = vpop.permute.xlu0 %618
    %s621 = sor.u32 256, 24
    %622 = vbcast.lane.b32.xlu0 %v608, %s621
    %v623 = vpop.permute.xlu0 %622
    %v624 = vlaneseq
    %v625 = vshrl.u32 %v624, 7
    %v626 = vsub.s32 1, %v625
    %v627 = vrot.slane %v31, %v626
    %629 = vbcast.lane.b32.xlu0 %v627, 256
    %v630 = vpop.permute.xlu0 %629
    %s632 = sor.u32 256, 8
    %633 = vbcast.lane.b32.xlu0 %v627, %s632
    %v634 = vpop.permute.xlu0 %633
    %s636 = sor.u32 256, 16
    %637 = vbcast.lane.b32.xlu0 %v627, %s636
    %v638 = vpop.permute.xlu0 %637
    %s640 = sor.u32 256, 24
    %641 = vbcast.lane.b32.xlu0 %v627, %s640
    %v642 = vpop.permute.xlu0 %641
    %v643 = vlaneseq
    %v644 = vshrl.u32 %v643, 7
    %v645 = vsub.s32 2, %v644
    %v646 = vrot.slane %v31, %v645
    %648 = vbcast.lane.b32.xlu0 %v646, 256
    %v649 = vpop.permute.xlu0 %648
    %s651 = sor.u32 256, 8
    %652 = vbcast.lane.b32.xlu0 %v646, %s651
    %v653 = vpop.permute.xlu0 %652
    %s655 = sor.u32 256, 16
    %656 = vbcast.lane.b32.xlu0 %v646, %s655
    %v657 = vpop.permute.xlu0 %656
    %s659 = sor.u32 256, 24
    %660 = vbcast.lane.b32.xlu0 %v646, %s659
    %v661 = vpop.permute.xlu0 %660
    %v662 = vlaneseq
    %v663 = vshrl.u32 %v662, 7
    %v664 = vsub.s32 3, %v663
    %v665 = vrot.slane %v31, %v664
    %667 = vbcast.lane.b32.xlu0 %v665, 256
    %v668 = vpop.permute.xlu0 %667
    %s670 = sor.u32 256, 8
    %671 = vbcast.lane.b32.xlu0 %v665, %s670
    %v672 = vpop.permute.xlu0 %671
    %s674 = sor.u32 256, 16
    %675 = vbcast.lane.b32.xlu0 %v665, %s674
    %v676 = vpop.permute.xlu0 %675
    %s678 = sor.u32 256, 24
    %679 = vbcast.lane.b32.xlu0 %v665, %s678
    %v680 = vpop.permute.xlu0 %679
    %v681 = vlaneseq
    %v682 = vshrl.u32 %v681, 7
    %v683 = vsub.s32 4, %v682
    %v684 = vrot.slane %v31, %v683
    %686 = vbcast.lane.b32.xlu0 %v684, 256
    %v687 = vpop.permute.xlu0 %686
    %s689 = sor.u32 256, 8
    %690 = vbcast.lane.b32.xlu0 %v684, %s689
    %v691 = vpop.permute.xlu0 %690
    %s693 = sor.u32 256, 16
    %694 = vbcast.lane.b32.xlu0 %v684, %s693
    %v695 = vpop.permute.xlu0 %694
    %s697 = sor.u32 256, 24
    %698 = vbcast.lane.b32.xlu0 %v684, %s697
    %v699 = vpop.permute.xlu0 %698
    %v700 = vlaneseq
    %v701 = vshrl.u32 %v700, 7
    %v702 = vsub.s32 5, %v701
    %v703 = vrot.slane %v31, %v702
    %705 = vbcast.lane.b32.xlu0 %v703, 256
    %v706 = vpop.permute.xlu0 %705
    %s708 = sor.u32 256, 8
    %709 = vbcast.lane.b32.xlu0 %v703, %s708
    %v710 = vpop.permute.xlu0 %709
    %s712 = sor.u32 256, 16
    %713 = vbcast.lane.b32.xlu0 %v703, %s712
    %v714 = vpop.permute.xlu0 %713
    %s716 = sor.u32 256, 24
    %717 = vbcast.lane.b32.xlu0 %v703, %s716
    %v718 = vpop.permute.xlu0 %717
    %v719 = vlaneseq
    %v720 = vshrl.u32 %v719, 7
    %v721 = vsub.s32 6, %v720
    %v722 = vrot.slane %v31, %v721
    %724 = vbcast.lane.b32.xlu0 %v722, 256
    %v725 = vpop.permute.xlu0 %724
    %s727 = sor.u32 256, 8
    %728 = vbcast.lane.b32.xlu0 %v722, %s727
    %v729 = vpop.permute.xlu0 %728
    %s731 = sor.u32 256, 16
    %732 = vbcast.lane.b32.xlu0 %v722, %s731
    %v733 = vpop.permute.xlu0 %732
    %s735 = sor.u32 256, 24
    %736 = vbcast.lane.b32.xlu0 %v722, %s735
    %v737 = vpop.permute.xlu0 %736
    %v738 = vlaneseq
    %v739 = vshrl.u32 %v738, 7
    %v740 = vsub.s32 7, %v739
    %v741 = vrot.slane %v31, %v740
    %743 = vbcast.lane.b32.xlu0 %v741, 256
    %v744 = vpop.permute.xlu0 %743
    %s746 = sor.u32 256, 8
    %747 = vbcast.lane.b32.xlu0 %v741, %s746
    %v748 = vpop.permute.xlu0 %747
    %s750 = sor.u32 256, 16
    %751 = vbcast.lane.b32.xlu0 %v741, %s750
    %v752 = vpop.permute.xlu0 %751
    %s754 = sor.u32 256, 24
    %755 = vbcast.lane.b32.xlu0 %v741, %s754
    %v756 = vpop.permute.xlu0 %755
    %v757 = vlaneseq
    %v758 = vshrl.u32 %v757, 7
    %v759 = vsub.s32 0, %v758
    %v760 = vrot.slane %v32, %v759
    %762 = vbcast.lane.b32.xlu0 %v760, 256
    %v763 = vpop.permute.xlu0 %762
    %s765 = sor.u32 256, 8
    %766 = vbcast.lane.b32.xlu0 %v760, %s765
    %v767 = vpop.permute.xlu0 %766
    %s769 = sor.u32 256, 16
    %770 = vbcast.lane.b32.xlu0 %v760, %s769
    %v771 = vpop.permute.xlu0 %770
    %s773 = sor.u32 256, 24
    %774 = vbcast.lane.b32.xlu0 %v760, %s773
    %v775 = vpop.permute.xlu0 %774
    %v776 = vlaneseq
    %v777 = vshrl.u32 %v776, 7
    %v778 = vsub.s32 1, %v777
    %v779 = vrot.slane %v32, %v778
    %781 = vbcast.lane.b32.xlu0 %v779, 256
    %v782 = vpop.permute.xlu0 %781
    %s784 = sor.u32 256, 8
    %785 = vbcast.lane.b32.xlu0 %v779, %s784
    %v786 = vpop.permute.xlu0 %785
    %s788 = sor.u32 256, 16
    %789 = vbcast.lane.b32.xlu0 %v779, %s788
    %v790 = vpop.permute.xlu0 %789
    %s792 = sor.u32 256, 24
    %793 = vbcast.lane.b32.xlu0 %v779, %s792
    %v794 = vpop.permute.xlu0 %793
    %v795 = vlaneseq
    %v796 = vshrl.u32 %v795, 7
    %v797 = vsub.s32 2, %v796
    %v798 = vrot.slane %v32, %v797
    %800 = vbcast.lane.b32.xlu0 %v798, 256
    %v801 = vpop.permute.xlu0 %800
    %s803 = sor.u32 256, 8
    %804 = vbcast.lane.b32.xlu0 %v798, %s803
    %v805 = vpop.permute.xlu0 %804
    %s807 = sor.u32 256, 16
    %808 = vbcast.lane.b32.xlu0 %v798, %s807
    %v809 = vpop.permute.xlu0 %808
    %s811 = sor.u32 256, 24
    %812 = vbcast.lane.b32.xlu0 %v798, %s811
    %v813 = vpop.permute.xlu0 %812
    %v814 = vlaneseq
    %v815 = vshrl.u32 %v814, 7
    %v816 = vsub.s32 3, %v815
    %v817 = vrot.slane %v32, %v816
    %819 = vbcast.lane.b32.xlu0 %v817, 256
    %v820 = vpop.permute.xlu0 %819
    %s822 = sor.u32 256, 8
    %823 = vbcast.lane.b32.xlu0 %v817, %s822
    %v824 = vpop.permute.xlu0 %823
    %s826 = sor.u32 256, 16
    %827 = vbcast.lane.b32.xlu0 %v817, %s826
    %v828 = vpop.permute.xlu0 %827
    %s830 = sor.u32 256, 24
    %831 = vbcast.lane.b32.xlu0 %v817, %s830
    %v832 = vpop.permute.xlu0 %831
    %v833 = vlaneseq
    %v834 = vshrl.u32 %v833, 7
    %v835 = vsub.s32 4, %v834
    %v836 = vrot.slane %v32, %v835
    %838 = vbcast.lane.b32.xlu0 %v836, 256
    %v839 = vpop.permute.xlu0 %838
    %s841 = sor.u32 256, 8
    %842 = vbcast.lane.b32.xlu0 %v836, %s841
    %v843 = vpop.permute.xlu0 %842
    %s845 = sor.u32 256, 16
    %846 = vbcast.lane.b32.xlu0 %v836, %s845
    %v847 = vpop.permute.xlu0 %846
    %s849 = sor.u32 256, 24
    %850 = vbcast.lane.b32.xlu0 %v836, %s849
    %v851 = vpop.permute.xlu0 %850
    %v852 = vlaneseq
    %v853 = vshrl.u32 %v852, 7
    %v854 = vsub.s32 5, %v853
    %v855 = vrot.slane %v32, %v854
    %857 = vbcast.lane.b32.xlu0 %v855, 256
    %v858 = vpop.permute.xlu0 %857
    %s860 = sor.u32 256, 8
    %861 = vbcast.lane.b32.xlu0 %v855, %s860
    %v862 = vpop.permute.xlu0 %861
    %s864 = sor.u32 256, 16
    %865 = vbcast.lane.b32.xlu0 %v855, %s864
    %v866 = vpop.permute.xlu0 %865
    %s868 = sor.u32 256, 24
    %869 = vbcast.lane.b32.xlu0 %v855, %s868
    %v870 = vpop.permute.xlu0 %869
    %v871 = vlaneseq
    %v872 = vshrl.u32 %v871, 7
    %v873 = vsub.s32 6, %v872
    %v874 = vrot.slane %v32, %v873
    %876 = vbcast.lane.b32.xlu0 %v874, 256
    %v877 = vpop.permute.xlu0 %876
    %s879 = sor.u32 256, 8
    %880 = vbcast.lane.b32.xlu0 %v874, %s879
    %v881 = vpop.permute.xlu0 %880
    %s883 = sor.u32 256, 16
    %884 = vbcast.lane.b32.xlu0 %v874, %s883
    %v885 = vpop.permute.xlu0 %884
    %s887 = sor.u32 256, 24
    %888 = vbcast.lane.b32.xlu0 %v874, %s887
    %v889 = vpop.permute.xlu0 %888
    %v890 = vlaneseq
    %v891 = vshrl.u32 %v890, 7
    %v892 = vsub.s32 7, %v891
    %v893 = vrot.slane %v32, %v892
    %895 = vbcast.lane.b32.xlu0 %v893, 256
    %v896 = vpop.permute.xlu0 %895
    %s898 = sor.u32 256, 8
    %899 = vbcast.lane.b32.xlu0 %v893, %s898
    %v900 = vpop.permute.xlu0 %899
    %s902 = sor.u32 256, 16
    %903 = vbcast.lane.b32.xlu0 %v893, %s902
    %v904 = vpop.permute.xlu0 %903
    %s906 = sor.u32 256, 24
    %907 = vbcast.lane.b32.xlu0 %v893, %s906
    %v908 = vpop.permute.xlu0 %907
    %v909 = vlaneseq
    %v910 = vshrl.u32 %v909, 7
    %v911 = vsub.s32 0, %v910
    %v912 = vrot.slane %v33, %v911
    %914 = vbcast.lane.b32.xlu0 %v912, 256
    %v915 = vpop.permute.xlu0 %914
    %s917 = sor.u32 256, 8
    %918 = vbcast.lane.b32.xlu0 %v912, %s917
    %v919 = vpop.permute.xlu0 %918
    %s921 = sor.u32 256, 16
    %922 = vbcast.lane.b32.xlu0 %v912, %s921
    %v923 = vpop.permute.xlu0 %922
    %s925 = sor.u32 256, 24
    %926 = vbcast.lane.b32.xlu0 %v912, %s925
    %v927 = vpop.permute.xlu0 %926
    %v928 = vlaneseq
    %v929 = vshrl.u32 %v928, 7
    %v930 = vsub.s32 1, %v929
    %v931 = vrot.slane %v33, %v930
    %933 = vbcast.lane.b32.xlu0 %v931, 256
    %v934 = vpop.permute.xlu0 %933
    %s936 = sor.u32 256, 8
    %937 = vbcast.lane.b32.xlu0 %v931, %s936
    %v938 = vpop.permute.xlu0 %937
    %s940 = sor.u32 256, 16
    %941 = vbcast.lane.b32.xlu0 %v931, %s940
    %v942 = vpop.permute.xlu0 %941
    %s944 = sor.u32 256, 24
    %945 = vbcast.lane.b32.xlu0 %v931, %s944
    %v946 = vpop.permute.xlu0 %945
    %v947 = vlaneseq
    %v948 = vshrl.u32 %v947, 7
    %v949 = vsub.s32 2, %v948
    %v950 = vrot.slane %v33, %v949
    %952 = vbcast.lane.b32.xlu0 %v950, 256
    %v953 = vpop.permute.xlu0 %952
    %s955 = sor.u32 256, 8
    %956 = vbcast.lane.b32.xlu0 %v950, %s955
    %v957 = vpop.permute.xlu0 %956
    %s959 = sor.u32 256, 16
    %960 = vbcast.lane.b32.xlu0 %v950, %s959
    %v961 = vpop.permute.xlu0 %960
    %s963 = sor.u32 256, 24
    %964 = vbcast.lane.b32.xlu0 %v950, %s963
    %v965 = vpop.permute.xlu0 %964
    %v966 = vlaneseq
    %v967 = vshrl.u32 %v966, 7
    %v968 = vsub.s32 3, %v967
    %v969 = vrot.slane %v33, %v968
    %971 = vbcast.lane.b32.xlu0 %v969, 256
    %v972 = vpop.permute.xlu0 %971
    %s974 = sor.u32 256, 8
    %975 = vbcast.lane.b32.xlu0 %v969, %s974
    %v976 = vpop.permute.xlu0 %975
    %s978 = sor.u32 256, 16
    %979 = vbcast.lane.b32.xlu0 %v969, %s978
    %v980 = vpop.permute.xlu0 %979
    %s982 = sor.u32 256, 24
    %983 = vbcast.lane.b32.xlu0 %v969, %s982
    %v984 = vpop.permute.xlu0 %983
    %v985 = vlaneseq
    %v986 = vshrl.u32 %v985, 7
    %v987 = vsub.s32 4, %v986
    %v988 = vrot.slane %v33, %v987
    %990 = vbcast.lane.b32.xlu0 %v988, 256
    %v991 = vpop.permute.xlu0 %990
    %s993 = sor.u32 256, 8
    %994 = vbcast.lane.b32.xlu0 %v988, %s993
    %v995 = vpop.permute.xlu0 %994
    %s997 = sor.u32 256, 16
    %998 = vbcast.lane.b32.xlu0 %v988, %s997
    %v999 = vpop.permute.xlu0 %998
    %s1001 = sor.u32 256, 24
    %1002 = vbcast.lane.b32.xlu0 %v988, %s1001
    %v1003 = vpop.permute.xlu0 %1002
    %v1004 = vlaneseq
    %v1005 = vshrl.u32 %v1004, 7
    %v1006 = vsub.s32 5, %v1005
    %v1007 = vrot.slane %v33, %v1006
    %1009 = vbcast.lane.b32.xlu0 %v1007, 256
    %v1010 = vpop.permute.xlu0 %1009
    %s1012 = sor.u32 256, 8
    %1013 = vbcast.lane.b32.xlu0 %v1007, %s1012
    %v1014 = vpop.permute.xlu0 %1013
    %s1016 = sor.u32 256, 16
    %1017 = vbcast.lane.b32.xlu0 %v1007, %s1016
    %v1018 = vpop.permute.xlu0 %1017
    %s1020 = sor.u32 256, 24
    %1021 = vbcast.lane.b32.xlu0 %v1007, %s1020
    %v1022 = vpop.permute.xlu0 %1021
    %v1023 = vlaneseq
    %v1024 = vshrl.u32 %v1023, 7
    %v1025 = vsub.s32 6, %v1024
    %v1026 = vrot.slane %v33, %v1025
    %1028 = vbcast.lane.b32.xlu0 %v1026, 256
    %v1029 = vpop.permute.xlu0 %1028
    %s1031 = sor.u32 256, 8
    %1032 = vbcast.lane.b32.xlu0 %v1026, %s1031
    %v1033 = vpop.permute.xlu0 %1032
    %s1035 = sor.u32 256, 16
    %1036 = vbcast.lane.b32.xlu0 %v1026, %s1035
    %v1037 = vpop.permute.xlu0 %1036
    %s1039 = sor.u32 256, 24
    %1040 = vbcast.lane.b32.xlu0 %v1026, %s1039
    %v1041 = vpop.permute.xlu0 %1040
    %v1042 = vlaneseq
    %v1043 = vshrl.u32 %v1042, 7
    %v1044 = vsub.s32 7, %v1043
    %v1045 = vrot.slane %v33, %v1044
    %1047 = vbcast.lane.b32.xlu0 %v1045, 256
    %v1048 = vpop.permute.xlu0 %1047
    %s1050 = sor.u32 256, 8
    %1051 = vbcast.lane.b32.xlu0 %v1045, %s1050
    %v1052 = vpop.permute.xlu0 %1051
    %s1054 = sor.u32 256, 16
    %1055 = vbcast.lane.b32.xlu0 %v1045, %s1054
    %v1056 = vpop.permute.xlu0 %1055
    %s1058 = sor.u32 256, 24
    %1059 = vbcast.lane.b32.xlu0 %v1045, %s1058
    %v1060 = vpop.permute.xlu0 %1059
    %v1061 = vlaneseq
    %v1062 = vshrl.u32 %v1061, 7
    %v1063 = vsub.s32 0, %v1062
    %v1064 = vrot.slane %v34, %v1063
    %1066 = vbcast.lane.b32.xlu0 %v1064, 256
    %v1067 = vpop.permute.xlu0 %1066
    %s1069 = sor.u32 256, 8
    %1070 = vbcast.lane.b32.xlu0 %v1064, %s1069
    %v1071 = vpop.permute.xlu0 %1070
    %s1073 = sor.u32 256, 16
    %1074 = vbcast.lane.b32.xlu0 %v1064, %s1073
    %v1075 = vpop.permute.xlu0 %1074
    %s1077 = sor.u32 256, 24
    %1078 = vbcast.lane.b32.xlu0 %v1064, %s1077
    %v1079 = vpop.permute.xlu0 %1078
    %v1080 = vlaneseq
    %v1081 = vshrl.u32 %v1080, 7
    %v1082 = vsub.s32 1, %v1081
    %v1083 = vrot.slane %v34, %v1082
    %1085 = vbcast.lane.b32.xlu0 %v1083, 256
    %v1086 = vpop.permute.xlu0 %1085
    %s1088 = sor.u32 256, 8
    %1089 = vbcast.lane.b32.xlu0 %v1083, %s1088
    %v1090 = vpop.permute.xlu0 %1089
    %s1092 = sor.u32 256, 16
    %1093 = vbcast.lane.b32.xlu0 %v1083, %s1092
    %v1094 = vpop.permute.xlu0 %1093
    %s1096 = sor.u32 256, 24
    %1097 = vbcast.lane.b32.xlu0 %v1083, %s1096
    %v1098 = vpop.permute.xlu0 %1097
    %v1099 = vlaneseq
    %v1100 = vshrl.u32 %v1099, 7
    %v1101 = vsub.s32 2, %v1100
    %v1102 = vrot.slane %v34, %v1101
    %1104 = vbcast.lane.b32.xlu0 %v1102, 256
    %v1105 = vpop.permute.xlu0 %1104
    %s1107 = sor.u32 256, 8
    %1108 = vbcast.lane.b32.xlu0 %v1102, %s1107
    %v1109 = vpop.permute.xlu0 %1108
    %s1111 = sor.u32 256, 16
    %1112 = vbcast.lane.b32.xlu0 %v1102, %s1111
    %v1113 = vpop.permute.xlu0 %1112
    %s1115 = sor.u32 256, 24
    %1116 = vbcast.lane.b32.xlu0 %v1102, %s1115
    %v1117 = vpop.permute.xlu0 %1116
    %v1118 = vlaneseq
    %v1119 = vshrl.u32 %v1118, 7
    %v1120 = vsub.s32 3, %v1119
    %v1121 = vrot.slane %v34, %v1120
    %1123 = vbcast.lane.b32.xlu0 %v1121, 256
    %v1124 = vpop.permute.xlu0 %1123
    %s1126 = sor.u32 256, 8
    %1127 = vbcast.lane.b32.xlu0 %v1121, %s1126
    %v1128 = vpop.permute.xlu0 %1127
    %s1130 = sor.u32 256, 16
    %1131 = vbcast.lane.b32.xlu0 %v1121, %s1130
    %v1132 = vpop.permute.xlu0 %1131
    %s1134 = sor.u32 256, 24
    %1135 = vbcast.lane.b32.xlu0 %v1121, %s1134
    %v1136 = vpop.permute.xlu0 %1135
    %v1137 = vlaneseq
    %v1138 = vshrl.u32 %v1137, 7
    %v1139 = vsub.s32 4, %v1138
    %v1140 = vrot.slane %v34, %v1139
    %1142 = vbcast.lane.b32.xlu0 %v1140, 256
    %v1143 = vpop.permute.xlu0 %1142
    %s1145 = sor.u32 256, 8
    %1146 = vbcast.lane.b32.xlu0 %v1140, %s1145
    %v1147 = vpop.permute.xlu0 %1146
    %s1149 = sor.u32 256, 16
    %1150 = vbcast.lane.b32.xlu0 %v1140, %s1149
    %v1151 = vpop.permute.xlu0 %1150
    %s1153 = sor.u32 256, 24
    %1154 = vbcast.lane.b32.xlu0 %v1140, %s1153
    %v1155 = vpop.permute.xlu0 %1154
    %v1156 = vlaneseq
    %v1157 = vshrl.u32 %v1156, 7
    %v1158 = vsub.s32 5, %v1157
    %v1159 = vrot.slane %v34, %v1158
    %1161 = vbcast.lane.b32.xlu0 %v1159, 256
    %v1162 = vpop.permute.xlu0 %1161
    %s1164 = sor.u32 256, 8
    %1165 = vbcast.lane.b32.xlu0 %v1159, %s1164
    %v1166 = vpop.permute.xlu0 %1165
    %s1168 = sor.u32 256, 16
    %1169 = vbcast.lane.b32.xlu0 %v1159, %s1168
    %v1170 = vpop.permute.xlu0 %1169
    %s1172 = sor.u32 256, 24
    %1173 = vbcast.lane.b32.xlu0 %v1159, %s1172
    %v1174 = vpop.permute.xlu0 %1173
    %v1175 = vlaneseq
    %v1176 = vshrl.u32 %v1175, 7
    %v1177 = vsub.s32 6, %v1176
    %v1178 = vrot.slane %v34, %v1177
    %1180 = vbcast.lane.b32.xlu0 %v1178, 256
    %v1181 = vpop.permute.xlu0 %1180
    %s1183 = sor.u32 256, 8
    %1184 = vbcast.lane.b32.xlu0 %v1178, %s1183
    %v1185 = vpop.permute.xlu0 %1184
    %s1187 = sor.u32 256, 16
    %1188 = vbcast.lane.b32.xlu0 %v1178, %s1187
    %v1189 = vpop.permute.xlu0 %1188
    %s1191 = sor.u32 256, 24
    %1192 = vbcast.lane.b32.xlu0 %v1178, %s1191
    %v1193 = vpop.permute.xlu0 %1192
    %v1194 = vlaneseq
    %v1195 = vshrl.u32 %v1194, 7
    %v1196 = vsub.s32 7, %v1195
    %v1197 = vrot.slane %v34, %v1196
    %1199 = vbcast.lane.b32.xlu0 %v1197, 256
    %v1200 = vpop.permute.xlu0 %1199
    %s1202 = sor.u32 256, 8
    %1203 = vbcast.lane.b32.xlu0 %v1197, %s1202
    %v1204 = vpop.permute.xlu0 %1203
    %s1206 = sor.u32 256, 16
    %1207 = vbcast.lane.b32.xlu0 %v1197, %s1206
    %v1208 = vpop.permute.xlu0 %1207
    %s1210 = sor.u32 256, 24
    %1211 = vbcast.lane.b32.xlu0 %v1197, %s1210
    %v1212 = vpop.permute.xlu0 %1211
    %v1213 = vlaneseq
    %v1214 = vshrl.u32 %v1213, 7
    %v1215 = vsub.s32 0, %v1214
    %v1216 = vrot.slane %v35, %v1215
    %1218 = vbcast.lane.b32.xlu0 %v1216, 256
    %v1219 = vpop.permute.xlu0 %1218
    %s1221 = sor.u32 256, 8
    %1222 = vbcast.lane.b32.xlu0 %v1216, %s1221
    %v1223 = vpop.permute.xlu0 %1222
    %s1225 = sor.u32 256, 16
    %1226 = vbcast.lane.b32.xlu0 %v1216, %s1225
    %v1227 = vpop.permute.xlu0 %1226
    %s1229 = sor.u32 256, 24
    %1230 = vbcast.lane.b32.xlu0 %v1216, %s1229
    %v1231 = vpop.permute.xlu0 %1230
    %v1232 = vlaneseq
    %v1233 = vshrl.u32 %v1232, 7
    %v1234 = vsub.s32 1, %v1233
    %v1235 = vrot.slane %v35, %v1234
    %1237 = vbcast.lane.b32.xlu0 %v1235, 256
    %v1238 = vpop.permute.xlu0 %1237
    %s1240 = sor.u32 256, 8
    %1241 = vbcast.lane.b32.xlu0 %v1235, %s1240
    %v1242 = vpop.permute.xlu0 %1241
    %s1244 = sor.u32 256, 16
    %1245 = vbcast.lane.b32.xlu0 %v1235, %s1244
    %v1246 = vpop.permute.xlu0 %1245
    %s1248 = sor.u32 256, 24
    %1249 = vbcast.lane.b32.xlu0 %v1235, %s1248
    %v1250 = vpop.permute.xlu0 %1249
    %v1251 = vlaneseq
    %v1252 = vshrl.u32 %v1251, 7
    %v1253 = vsub.s32 2, %v1252
    %v1254 = vrot.slane %v35, %v1253
    %1256 = vbcast.lane.b32.xlu0 %v1254, 256
    %v1257 = vpop.permute.xlu0 %1256
    %s1259 = sor.u32 256, 8
    %1260 = vbcast.lane.b32.xlu0 %v1254, %s1259
    %v1261 = vpop.permute.xlu0 %1260
    %s1263 = sor.u32 256, 16
    %1264 = vbcast.lane.b32.xlu0 %v1254, %s1263
    %v1265 = vpop.permute.xlu0 %1264
    %s1267 = sor.u32 256, 24
    %1268 = vbcast.lane.b32.xlu0 %v1254, %s1267
    %v1269 = vpop.permute.xlu0 %1268
    %v1270 = vlaneseq
    %v1271 = vshrl.u32 %v1270, 7
    %v1272 = vsub.s32 3, %v1271
    %v1273 = vrot.slane %v35, %v1272
    %1275 = vbcast.lane.b32.xlu0 %v1273, 256
    %v1276 = vpop.permute.xlu0 %1275
    %s1278 = sor.u32 256, 8
    %1279 = vbcast.lane.b32.xlu0 %v1273, %s1278
    %v1280 = vpop.permute.xlu0 %1279
    %s1282 = sor.u32 256, 16
    %1283 = vbcast.lane.b32.xlu0 %v1273, %s1282
    %v1284 = vpop.permute.xlu0 %1283
    %s1286 = sor.u32 256, 24
    %1287 = vbcast.lane.b32.xlu0 %v1273, %s1286
    %v1288 = vpop.permute.xlu0 %1287
    %v1289 = vlaneseq
    %v1290 = vshrl.u32 %v1289, 7
    %v1291 = vsub.s32 4, %v1290
    %v1292 = vrot.slane %v35, %v1291
    %1294 = vbcast.lane.b32.xlu0 %v1292, 256
    %v1295 = vpop.permute.xlu0 %1294
    %s1297 = sor.u32 256, 8
    %1298 = vbcast.lane.b32.xlu0 %v1292, %s1297
    %v1299 = vpop.permute.xlu0 %1298
    %s1301 = sor.u32 256, 16
    %1302 = vbcast.lane.b32.xlu0 %v1292, %s1301
    %v1303 = vpop.permute.xlu0 %1302
    %s1305 = sor.u32 256, 24
    %1306 = vbcast.lane.b32.xlu0 %v1292, %s1305
    %v1307 = vpop.permute.xlu0 %1306
    %v1308 = vlaneseq
    %v1309 = vshrl.u32 %v1308, 7
    %v1310 = vsub.s32 5, %v1309
    %v1311 = vrot.slane %v35, %v1310
    %1313 = vbcast.lane.b32.xlu0 %v1311, 256
    %v1314 = vpop.permute.xlu0 %1313
    %s1316 = sor.u32 256, 8
    %1317 = vbcast.lane.b32.xlu0 %v1311, %s1316
    %v1318 = vpop.permute.xlu0 %1317
    %s1320 = sor.u32 256, 16
    %1321 = vbcast.lane.b32.xlu0 %v1311, %s1320
    %v1322 = vpop.permute.xlu0 %1321
    %s1324 = sor.u32 256, 24
    %1325 = vbcast.lane.b32.xlu0 %v1311, %s1324
    %v1326 = vpop.permute.xlu0 %1325
    %v1327 = vlaneseq
    %v1328 = vshrl.u32 %v1327, 7
    %v1329 = vsub.s32 6, %v1328
    %v1330 = vrot.slane %v35, %v1329
    %1332 = vbcast.lane.b32.xlu0 %v1330, 256
    %v1333 = vpop.permute.xlu0 %1332
    %s1335 = sor.u32 256, 8
    %1336 = vbcast.lane.b32.xlu0 %v1330, %s1335
    %v1337 = vpop.permute.xlu0 %1336
    %s1339 = sor.u32 256, 16
    %1340 = vbcast.lane.b32.xlu0 %v1330, %s1339
    %v1341 = vpop.permute.xlu0 %1340
    %s1343 = sor.u32 256, 24
    %1344 = vbcast.lane.b32.xlu0 %v1330, %s1343
    %v1345 = vpop.permute.xlu0 %1344
    %v1346 = vlaneseq
    %v1347 = vshrl.u32 %v1346, 7
    %v1348 = vsub.s32 7, %v1347
    %v1349 = vrot.slane %v35, %v1348
    %1351 = vbcast.lane.b32.xlu0 %v1349, 256
    %v1352 = vpop.permute.xlu0 %1351
    %s1354 = sor.u32 256, 8
    %1355 = vbcast.lane.b32.xlu0 %v1349, %s1354
    %v1356 = vpop.permute.xlu0 %1355
    %s1358 = sor.u32 256, 16
    %1359 = vbcast.lane.b32.xlu0 %v1349, %s1358
    %v1360 = vpop.permute.xlu0 %1359
    %s1362 = sor.u32 256, 24
    %1363 = vbcast.lane.b32.xlu0 %v1349, %s1362
    %v1364 = vpop.permute.xlu0 %1363
    %v1365 = vlaneseq
    %v1366 = vshrl.u32 %v1365, 7
    %v1367 = vsub.s32 0, %v1366
    %v1368 = vrot.slane %v36, %v1367
    %1370 = vbcast.lane.b32.xlu0 %v1368, 256
    %v1371 = vpop.permute.xlu0 %1370
    %s1373 = sor.u32 256, 8
    %1374 = vbcast.lane.b32.xlu0 %v1368, %s1373
    %v1375 = vpop.permute.xlu0 %1374
    %s1377 = sor.u32 256, 16
    %1378 = vbcast.lane.b32.xlu0 %v1368, %s1377
    %v1379 = vpop.permute.xlu0 %1378
    %s1381 = sor.u32 256, 24
    %1382 = vbcast.lane.b32.xlu0 %v1368, %s1381
    %v1383 = vpop.permute.xlu0 %1382
    %v1384 = vlaneseq
    %v1385 = vshrl.u32 %v1384, 7
    %v1386 = vsub.s32 1, %v1385
    %v1387 = vrot.slane %v36, %v1386
    %1389 = vbcast.lane.b32.xlu0 %v1387, 256
    %v1390 = vpop.permute.xlu0 %1389
    %s1392 = sor.u32 256, 8
    %1393 = vbcast.lane.b32.xlu0 %v1387, %s1392
    %v1394 = vpop.permute.xlu0 %1393
    %s1396 = sor.u32 256, 16
    %1397 = vbcast.lane.b32.xlu0 %v1387, %s1396
    %v1398 = vpop.permute.xlu0 %1397
    %s1400 = sor.u32 256, 24
    %1401 = vbcast.lane.b32.xlu0 %v1387, %s1400
    %v1402 = vpop.permute.xlu0 %1401
    %v1403 = vlaneseq
    %v1404 = vshrl.u32 %v1403, 7
    %v1405 = vsub.s32 2, %v1404
    %v1406 = vrot.slane %v36, %v1405
    %1408 = vbcast.lane.b32.xlu0 %v1406, 256
    %v1409 = vpop.permute.xlu0 %1408
    %s1411 = sor.u32 256, 8
    %1412 = vbcast.lane.b32.xlu0 %v1406, %s1411
    %v1413 = vpop.permute.xlu0 %1412
    %s1415 = sor.u32 256, 16
    %1416 = vbcast.lane.b32.xlu0 %v1406, %s1415
    %v1417 = vpop.permute.xlu0 %1416
    %s1419 = sor.u32 256, 24
    %1420 = vbcast.lane.b32.xlu0 %v1406, %s1419
    %v1421 = vpop.permute.xlu0 %1420
    %v1422 = vlaneseq
    %v1423 = vshrl.u32 %v1422, 7
    %v1424 = vsub.s32 3, %v1423
    %v1425 = vrot.slane %v36, %v1424
    %1427 = vbcast.lane.b32.xlu0 %v1425, 256
    %v1428 = vpop.permute.xlu0 %1427
    %s1430 = sor.u32 256, 8
    %1431 = vbcast.lane.b32.xlu0 %v1425, %s1430
    %v1432 = vpop.permute.xlu0 %1431
    %s1434 = sor.u32 256, 16
    %1435 = vbcast.lane.b32.xlu0 %v1425, %s1434
    %v1436 = vpop.permute.xlu0 %1435
    %s1438 = sor.u32 256, 24
    %1439 = vbcast.lane.b32.xlu0 %v1425, %s1438
    %v1440 = vpop.permute.xlu0 %1439
    %v1441 = vlaneseq
    %v1442 = vshrl.u32 %v1441, 7
    %v1443 = vsub.s32 4, %v1442
    %v1444 = vrot.slane %v36, %v1443
    %1446 = vbcast.lane.b32.xlu0 %v1444, 256
    %v1447 = vpop.permute.xlu0 %1446
    %s1449 = sor.u32 256, 8
    %1450 = vbcast.lane.b32.xlu0 %v1444, %s1449
    %v1451 = vpop.permute.xlu0 %1450
    %s1453 = sor.u32 256, 16
    %1454 = vbcast.lane.b32.xlu0 %v1444, %s1453
    %v1455 = vpop.permute.xlu0 %1454
    %s1457 = sor.u32 256, 24
    %1458 = vbcast.lane.b32.xlu0 %v1444, %s1457
    %v1459 = vpop.permute.xlu0 %1458
    %v1460 = vlaneseq
    %v1461 = vshrl.u32 %v1460, 7
    %v1462 = vsub.s32 5, %v1461
    %v1463 = vrot.slane %v36, %v1462
    %1465 = vbcast.lane.b32.xlu0 %v1463, 256
    %v1466 = vpop.permute.xlu0 %1465
    %s1468 = sor.u32 256, 8
    %1469 = vbcast.lane.b32.xlu0 %v1463, %s1468
    %v1470 = vpop.permute.xlu0 %1469
    %s1472 = sor.u32 256, 16
    %1473 = vbcast.lane.b32.xlu0 %v1463, %s1472
    %v1474 = vpop.permute.xlu0 %1473
    %s1476 = sor.u32 256, 24
    %1477 = vbcast.lane.b32.xlu0 %v1463, %s1476
    %v1478 = vpop.permute.xlu0 %1477
    %v1479 = vlaneseq
    %v1480 = vshrl.u32 %v1479, 7
    %v1481 = vsub.s32 6, %v1480
    %v1482 = vrot.slane %v36, %v1481
    %1484 = vbcast.lane.b32.xlu0 %v1482, 256
    %v1485 = vpop.permute.xlu0 %1484
    %s1487 = sor.u32 256, 8
    %1488 = vbcast.lane.b32.xlu0 %v1482, %s1487
    %v1489 = vpop.permute.xlu0 %1488
    %s1491 = sor.u32 256, 16
    %1492 = vbcast.lane.b32.xlu0 %v1482, %s1491
    %v1493 = vpop.permute.xlu0 %1492
    %s1495 = sor.u32 256, 24
    %1496 = vbcast.lane.b32.xlu0 %v1482, %s1495
    %v1497 = vpop.permute.xlu0 %1496
    %v1498 = vlaneseq
    %v1499 = vshrl.u32 %v1498, 7
    %v1500 = vsub.s32 7, %v1499
    %v1501 = vrot.slane %v36, %v1500
    %1503 = vbcast.lane.b32.xlu0 %v1501, 256
    %v1504 = vpop.permute.xlu0 %1503
    %s1506 = sor.u32 256, 8
    %1507 = vbcast.lane.b32.xlu0 %v1501, %s1506
    %v1508 = vpop.permute.xlu0 %1507
    %s1510 = sor.u32 256, 16
    %1511 = vbcast.lane.b32.xlu0 %v1501, %s1510
    %v1512 = vpop.permute.xlu0 %1511
    %s1514 = sor.u32 256, 24
    %1515 = vbcast.lane.b32.xlu0 %v1501, %s1514
    %v1516 = vpop.permute.xlu0 %1515
    %v1517 = vmul.f32 %v307, %v37
    %v1518 = vmul.f32 %v311, %v38
    %v1519 = vmul.f32 %v315, %v39
    %v1520 = vmul.f32 %v319, %v40
    %v1521 = vmul.f32 %v326, %v41
    %v1522 = vmul.f32 %v330, %v42
    %v1523 = vmul.f32 %v334, %v43
    %v1524 = vmul.f32 %v338, %v44
    %v1525 = vmul.f32 %v345, %v45
    %v1526 = vmul.f32 %v349, %v46
    %v1527 = vmul.f32 %v353, %v47
    %v1528 = vmul.f32 %v357, %v48
    %v1529 = vmul.f32 %v364, %v49
    %v1530 = vmul.f32 %v368, %v50
    %v1531 = vmul.f32 %v372, %v51
    %v1532 = vmul.f32 %v376, %v52
    %v1533 = vmul.f32 %v383, %v53
    %v1534 = vmul.f32 %v387, %v54
    %v1535 = vmul.f32 %v391, %v55
    %v1536 = vmul.f32 %v395, %v56
    %v1537 = vmul.f32 %v402, %v57
    %v1538 = vmul.f32 %v406, %v58
    %v1539 = vmul.f32 %v410, %v59
    %v1540 = vmul.f32 %v414, %v60
    %v1541 = vmul.f32 %v421, %v61
    %v1542 = vmul.f32 %v425, %v62
    %v1543 = vmul.f32 %v429, %v63
    %v1544 = vmul.f32 %v433, %v64
    %v1545 = vmul.f32 %v440, %v65
    %v1546 = vmul.f32 %v444, %v66
    %v1547 = vmul.f32 %v448, %v67
    %v1548 = vmul.f32 %v452, %v68
    %v1549 = vmul.f32 %v459, %v69
    %v1550 = vmul.f32 %v463, %v70
    %v1551 = vmul.f32 %v467, %v71
    %v1552 = vmul.f32 %v471, %v72
    %v1553 = vmul.f32 %v478, %v73
    %v1554 = vmul.f32 %v482, %v74
    %v1555 = vmul.f32 %v486, %v75
    %v1556 = vmul.f32 %v490, %v76
    %v1557 = vmul.f32 %v497, %v77
    %v1558 = vmul.f32 %v501, %v78
    %v1559 = vmul.f32 %v505, %v79
    %v1560 = vmul.f32 %v509, %v80
    %v1561 = vmul.f32 %v516, %v81
    %v1562 = vmul.f32 %v520, %v82
    %v1563 = vmul.f32 %v524, %v83
    %v1564 = vmul.f32 %v528, %v84
    %v1565 = vmul.f32 %v535, %v85
    %v1566 = vmul.f32 %v539, %v86
    %v1567 = vmul.f32 %v543, %v87
    %v1568 = vmul.f32 %v547, %v88
    %v1569 = vmul.f32 %v554, %v89
    %v1570 = vmul.f32 %v558, %v90
    %v1571 = vmul.f32 %v562, %v91
    %v1572 = vmul.f32 %v566, %v92
    %v1573 = vmul.f32 %v573, %v93
    %v1574 = vmul.f32 %v577, %v94
    %v1575 = vmul.f32 %v581, %v95
    %v1576 = vmul.f32 %v585, %v96
    %v1577 = vmul.f32 %v592, %v97
    %v1578 = vmul.f32 %v596, %v98
    %v1579 = vmul.f32 %v600, %v99
    %v1580 = vmul.f32 %v604, %v100
    %v1581 = vmul.f32 %v611, %v101
    %v1582 = vmul.f32 %v615, %v102
    %v1583 = vmul.f32 %v619, %v103
    %v1584 = vmul.f32 %v623, %v104
    %v1585 = vmul.f32 %v630, %v105
    %v1586 = vmul.f32 %v634, %v106
    %v1587 = vmul.f32 %v638, %v107
    %v1588 = vmul.f32 %v642, %v108
    %v1589 = vmul.f32 %v649, %v109
    %v1590 = vmul.f32 %v653, %v110
    %v1591 = vmul.f32 %v657, %v111
    %v1592 = vmul.f32 %v661, %v112
    %v1593 = vmul.f32 %v668, %v113
    %v1594 = vmul.f32 %v672, %v114
    %v1595 = vmul.f32 %v676, %v115
    %v1596 = vmul.f32 %v680, %v116
    %v1597 = vmul.f32 %v687, %v117
    %v1598 = vmul.f32 %v691, %v118
    %v1599 = vmul.f32 %v695, %v119
    %v1600 = vmul.f32 %v699, %v120
    %v1601 = vmul.f32 %v706, %v121
    %v1602 = vmul.f32 %v710, %v122
    %v1603 = vmul.f32 %v714, %v123
    %v1604 = vmul.f32 %v718, %v124
    %v1605 = vmul.f32 %v725, %v125
    %v1606 = vmul.f32 %v729, %v126
    %v1607 = vmul.f32 %v733, %v127
    %v1608 = vmul.f32 %v737, %v128
    %v1609 = vmul.f32 %v744, %v129
    %v1610 = vmul.f32 %v748, %v130
    %v1611 = vmul.f32 %v752, %v131
    %v1612 = vmul.f32 %v756, %v132
    %v1613 = vmul.f32 %v763, %v133
    %v1614 = vmul.f32 %v767, %v134
    %v1615 = vmul.f32 %v771, %v135
    %v1616 = vmul.f32 %v775, %v136
    %v1617 = vmul.f32 %v782, %v137
    %v1618 = vmul.f32 %v786, %v138
    %v1619 = vmul.f32 %v790, %v139
    %v1620 = vmul.f32 %v794, %v140
    %v1621 = vmul.f32 %v801, %v141
    %v1622 = vmul.f32 %v805, %v142
    %v1623 = vmul.f32 %v809, %v143
    %v1624 = vmul.f32 %v813, %v144
    %v1625 = vmul.f32 %v820, %v145
    %v1626 = vmul.f32 %v824, %v146
    %v1627 = vmul.f32 %v828, %v147
    %v1628 = vmul.f32 %v832, %v148
    %v1629 = vmul.f32 %v839, %v149
    %v1630 = vmul.f32 %v843, %v150
    %v1631 = vmul.f32 %v847, %v151
    %v1632 = vmul.f32 %v851, %v152
    %v1633 = vmul.f32 %v858, %v153
    %v1634 = vmul.f32 %v862, %v154
    %v1635 = vmul.f32 %v866, %v155
    %v1636 = vmul.f32 %v870, %v156
    %v1637 = vmul.f32 %v877, %v157
    %v1638 = vmul.f32 %v881, %v158
    %v1639 = vmul.f32 %v885, %v159
    %v1640 = vmul.f32 %v889, %v160
    %v1641 = vmul.f32 %v896, %v161
    %v1642 = vmul.f32 %v900, %v162
    %v1643 = vmul.f32 %v904, %v163
    %v1644 = vmul.f32 %v908, %v164
    %v1645 = vmul.f32 %v915, %v165
    %v1646 = vmul.f32 %v919, %v166
    %v1647 = vmul.f32 %v923, %v167
    %v1648 = vmul.f32 %v927, %v168
    %v1649 = vmul.f32 %v934, %v169
    %v1650 = vmul.f32 %v938, %v170
    %v1651 = vmul.f32 %v942, %v171
    %v1652 = vmul.f32 %v946, %v172
    %v1653 = vmul.f32 %v953, %v173
    %v1654 = vmul.f32 %v957, %v174
    %v1655 = vmul.f32 %v961, %v175
    %v1656 = vmul.f32 %v965, %v176
    %v1657 = vmul.f32 %v972, %v177
    %v1658 = vmul.f32 %v976, %v178
    %v1659 = vmul.f32 %v980, %v179
    %v1660 = vmul.f32 %v984, %v180
    %v1661 = vmul.f32 %v991, %v181
    %v1662 = vmul.f32 %v995, %v182
    %v1663 = vmul.f32 %v999, %v183
    %v1664 = vmul.f32 %v1003, %v184
    %v1665 = vmul.f32 %v1010, %v185
    %v1666 = vmul.f32 %v1014, %v186
    %v1667 = vmul.f32 %v1018, %v187
    %v1668 = vmul.f32 %v1022, %v188
    %v1669 = vmul.f32 %v1029, %v189
    %v1670 = vmul.f32 %v1033, %v190
    %v1671 = vmul.f32 %v1037, %v191
    %v1672 = vmul.f32 %v1041, %v192
    %v1673 = vmul.f32 %v1048, %v193
    %v1674 = vmul.f32 %v1052, %v194
    %v1675 = vmul.f32 %v1056, %v195
    %v1676 = vmul.f32 %v1060, %v196
    %v1677 = vmul.f32 %v1067, %v197
    %v1678 = vmul.f32 %v1071, %v198
    %v1679 = vmul.f32 %v1075, %v199
    %v1680 = vmul.f32 %v1079, %v200
    %v1681 = vmul.f32 %v1086, %v201
    %v1682 = vmul.f32 %v1090, %v202
    %v1683 = vmul.f32 %v1094, %v203
    %v1684 = vmul.f32 %v1098, %v204
    %v1685 = vmul.f32 %v1105, %v205
    %v1686 = vmul.f32 %v1109, %v206
    %v1687 = vmul.f32 %v1113, %v207
    %v1688 = vmul.f32 %v1117, %v208
    %v1689 = vmul.f32 %v1124, %v209
    %v1690 = vmul.f32 %v1128, %v210
    %v1691 = vmul.f32 %v1132, %v211
    %v1692 = vmul.f32 %v1136, %v212
    %v1693 = vmul.f32 %v1143, %v213
    %v1694 = vmul.f32 %v1147, %v214
    %v1695 = vmul.f32 %v1151, %v215
    %v1696 = vmul.f32 %v1155, %v216
    %v1697 = vmul.f32 %v1162, %v217
    %v1698 = vmul.f32 %v1166, %v218
    %v1699 = vmul.f32 %v1170, %v219
    %v1700 = vmul.f32 %v1174, %v220
    %v1701 = vmul.f32 %v1181, %v221
    %v1702 = vmul.f32 %v1185, %v222
    %v1703 = vmul.f32 %v1189, %v223
    %v1704 = vmul.f32 %v1193, %v224
    %v1705 = vmul.f32 %v1200, %v225
    %v1706 = vmul.f32 %v1204, %v226
    %v1707 = vmul.f32 %v1208, %v227
    %v1708 = vmul.f32 %v1212, %v228
    %v1709 = vmul.f32 %v1219, %v229
    %v1710 = vmul.f32 %v1223, %v230
    %v1711 = vmul.f32 %v1227, %v231
    %v1712 = vmul.f32 %v1231, %v232
    %v1713 = vmul.f32 %v1238, %v233
    %v1714 = vmul.f32 %v1242, %v234
    %v1715 = vmul.f32 %v1246, %v235
    %v1716 = vmul.f32 %v1250, %v236
    %v1717 = vmul.f32 %v1257, %v237
    %v1718 = vmul.f32 %v1261, %v238
    %v1719 = vmul.f32 %v1265, %v239
    %v1720 = vmul.f32 %v1269, %v240
    %v1721 = vmul.f32 %v1276, %v241
    %v1722 = vmul.f32 %v1280, %v242
    %v1723 = vmul.f32 %v1284, %v243
    %v1724 = vmul.f32 %v1288, %v244
    %v1725 = vmul.f32 %v1295, %v245
    %v1726 = vmul.f32 %v1299, %v246
    %v1727 = vmul.f32 %v1303, %v247
    %v1728 = vmul.f32 %v1307, %v248
    %v1729 = vmul.f32 %v1314, %v249
    %v1730 = vmul.f32 %v1318, %v250
    %v1731 = vmul.f32 %v1322, %v251
    %v1732 = vmul.f32 %v1326, %v252
    %v1733 = vmul.f32 %v1333, %v253
    %v1734 = vmul.f32 %v1337, %v254
    %v1735 = vmul.f32 %v1341, %v255
    %v1736 = vmul.f32 %v1345, %v256
    %v1737 = vmul.f32 %v1352, %v257
    %v1738 = vmul.f32 %v1356, %v258
    %v1739 = vmul.f32 %v1360, %v259
    %v1740 = vmul.f32 %v1364, %v260
    %v1741 = vmul.f32 %v1371, %v261
    %v1742 = vmul.f32 %v1375, %v262
    %v1743 = vmul.f32 %v1379, %v263
    %v1744 = vmul.f32 %v1383, %v264
    %v1745 = vmul.f32 %v1390, %v265
    %v1746 = vmul.f32 %v1394, %v266
    %v1747 = vmul.f32 %v1398, %v267
    %v1748 = vmul.f32 %v1402, %v268
    %v1749 = vmul.f32 %v1409, %v269
    %v1750 = vmul.f32 %v1413, %v270
    %v1751 = vmul.f32 %v1417, %v271
    %v1752 = vmul.f32 %v1421, %v272
    %v1753 = vmul.f32 %v1428, %v273
    %v1754 = vmul.f32 %v1432, %v274
    %v1755 = vmul.f32 %v1436, %v275
    %v1756 = vmul.f32 %v1440, %v276
    %v1757 = vmul.f32 %v1447, %v277
    %v1758 = vmul.f32 %v1451, %v278
    %v1759 = vmul.f32 %v1455, %v279
    %v1760 = vmul.f32 %v1459, %v280
    %v1761 = vmul.f32 %v1466, %v281
    %v1762 = vmul.f32 %v1470, %v282
    %v1763 = vmul.f32 %v1474, %v283
    %v1764 = vmul.f32 %v1478, %v284
    %v1765 = vmul.f32 %v1485, %v285
    %v1766 = vmul.f32 %v1489, %v286
    %v1767 = vmul.f32 %v1493, %v287
    %v1768 = vmul.f32 %v1497, %v288
    %v1769 = vmul.f32 %v1504, %v289
    %v1770 = vmul.f32 %v1508, %v290
    %v1771 = vmul.f32 %v1512, %v291
    %v1772 = vmul.f32 %v1516, %v292
    %v1773 = vadd.f32 %v1517, %v1518
    %v1774 = vadd.f32 %v1773, %v1519
    %v1775 = vadd.f32 %v1774, %v1520
    %v1776 = vrot.slane %v1775, 4
    %v1777 = vadd.f32 %v1775, %v1776
    %v1778 = vrot.slane %v1777, 2
    %v1779 = vadd.f32 %v1777, %v1778
    %v1780 = vrot.slane %v1779, 1
    %v1781 = vadd.f32 %v1779, %v1780
    %v1782 = vadd.f32 %v1521, %v1522
    %v1783 = vadd.f32 %v1782, %v1523
    %v1784 = vadd.f32 %v1783, %v1524
    %v1785 = vrot.slane %v1784, 4
    %v1786 = vadd.f32 %v1784, %v1785
    %v1787 = vrot.slane %v1786, 2
    %v1788 = vadd.f32 %v1786, %v1787
    %v1789 = vrot.slane %v1788, 1
    %v1790 = vadd.f32 %v1788, %v1789
    %v1791 = vadd.f32 %v1525, %v1526
    %v1792 = vadd.f32 %v1791, %v1527
    %v1793 = vadd.f32 %v1792, %v1528
    %v1794 = vrot.slane %v1793, 4
    %v1795 = vadd.f32 %v1793, %v1794
    %v1796 = vrot.slane %v1795, 2
    %v1797 = vadd.f32 %v1795, %v1796
    %v1798 = vrot.slane %v1797, 1
    %v1799 = vadd.f32 %v1797, %v1798
    %v1800 = vadd.f32 %v1529, %v1530
    %v1801 = vadd.f32 %v1800, %v1531
    %v1802 = vadd.f32 %v1801, %v1532
    %v1803 = vrot.slane %v1802, 4
    %v1804 = vadd.f32 %v1802, %v1803
    %v1805 = vrot.slane %v1804, 2
    %v1806 = vadd.f32 %v1804, %v1805
    %v1807 = vrot.slane %v1806, 1
    %v1808 = vadd.f32 %v1806, %v1807
    %v1809 = vadd.f32 %v1533, %v1534
    %v1810 = vadd.f32 %v1809, %v1535
    %v1811 = vadd.f32 %v1810, %v1536
    %v1812 = vrot.slane %v1811, 4
    %v1813 = vadd.f32 %v1811, %v1812
    %v1814 = vrot.slane %v1813, 2
    %v1815 = vadd.f32 %v1813, %v1814
    %v1816 = vrot.slane %v1815, 1
    %v1817 = vadd.f32 %v1815, %v1816
    %v1818 = vadd.f32 %v1537, %v1538
    %v1819 = vadd.f32 %v1818, %v1539
    %v1820 = vadd.f32 %v1819, %v1540
    %v1821 = vrot.slane %v1820, 4
    %v1822 = vadd.f32 %v1820, %v1821
    %v1823 = vrot.slane %v1822, 2
    %v1824 = vadd.f32 %v1822, %v1823
    %v1825 = vrot.slane %v1824, 1
    %v1826 = vadd.f32 %v1824, %v1825
    %v1827 = vadd.f32 %v1541, %v1542
    %v1828 = vadd.f32 %v1827, %v1543
    %v1829 = vadd.f32 %v1828, %v1544
    %v1830 = vrot.slane %v1829, 4
    %v1831 = vadd.f32 %v1829, %v1830
    %v1832 = vrot.slane %v1831, 2
    %v1833 = vadd.f32 %v1831, %v1832
    %v1834 = vrot.slane %v1833, 1
    %v1835 = vadd.f32 %v1833, %v1834
    %v1836 = vadd.f32 %v1545, %v1546
    %v1837 = vadd.f32 %v1836, %v1547
    %v1838 = vadd.f32 %v1837, %v1548
    %v1839 = vrot.slane %v1838, 4
    %v1840 = vadd.f32 %v1838, %v1839
    %v1841 = vrot.slane %v1840, 2
    %v1842 = vadd.f32 %v1840, %v1841
    %v1843 = vrot.slane %v1842, 1
    %v1844 = vadd.f32 %v1842, %v1843
    %v1845 = vadd.f32 %v1549, %v1550
    %v1846 = vadd.f32 %v1845, %v1551
    %v1847 = vadd.f32 %v1846, %v1552
    %v1848 = vrot.slane %v1847, 4
    %v1849 = vadd.f32 %v1847, %v1848
    %v1850 = vrot.slane %v1849, 2
    %v1851 = vadd.f32 %v1849, %v1850
    %v1852 = vrot.slane %v1851, 1
    %v1853 = vadd.f32 %v1851, %v1852
    %v1854 = vadd.f32 %v1553, %v1554
    %v1855 = vadd.f32 %v1854, %v1555
    %v1856 = vadd.f32 %v1855, %v1556
    %v1857 = vrot.slane %v1856, 4
    %v1858 = vadd.f32 %v1856, %v1857
    %v1859 = vrot.slane %v1858, 2
    %v1860 = vadd.f32 %v1858, %v1859
    %v1861 = vrot.slane %v1860, 1
    %v1862 = vadd.f32 %v1860, %v1861
    %v1863 = vadd.f32 %v1557, %v1558
    %v1864 = vadd.f32 %v1863, %v1559
    %v1865 = vadd.f32 %v1864, %v1560
    %v1866 = vrot.slane %v1865, 4
    %v1867 = vadd.f32 %v1865, %v1866
    %v1868 = vrot.slane %v1867, 2
    %v1869 = vadd.f32 %v1867, %v1868
    %v1870 = vrot.slane %v1869, 1
    %v1871 = vadd.f32 %v1869, %v1870
    %v1872 = vadd.f32 %v1561, %v1562
    %v1873 = vadd.f32 %v1872, %v1563
    %v1874 = vadd.f32 %v1873, %v1564
    %v1875 = vrot.slane %v1874, 4
    %v1876 = vadd.f32 %v1874, %v1875
    %v1877 = vrot.slane %v1876, 2
    %v1878 = vadd.f32 %v1876, %v1877
    %v1879 = vrot.slane %v1878, 1
    %v1880 = vadd.f32 %v1878, %v1879
    %v1881 = vadd.f32 %v1565, %v1566
    %v1882 = vadd.f32 %v1881, %v1567
    %v1883 = vadd.f32 %v1882, %v1568
    %v1884 = vrot.slane %v1883, 4
    %v1885 = vadd.f32 %v1883, %v1884
    %v1886 = vrot.slane %v1885, 2
    %v1887 = vadd.f32 %v1885, %v1886
    %v1888 = vrot.slane %v1887, 1
    %v1889 = vadd.f32 %v1887, %v1888
    %v1890 = vadd.f32 %v1569, %v1570
    %v1891 = vadd.f32 %v1890, %v1571
    %v1892 = vadd.f32 %v1891, %v1572
    %v1893 = vrot.slane %v1892, 4
    %v1894 = vadd.f32 %v1892, %v1893
    %v1895 = vrot.slane %v1894, 2
    %v1896 = vadd.f32 %v1894, %v1895
    %v1897 = vrot.slane %v1896, 1
    %v1898 = vadd.f32 %v1896, %v1897
    %v1899 = vadd.f32 %v1573, %v1574
    %v1900 = vadd.f32 %v1899, %v1575
    %v1901 = vadd.f32 %v1900, %v1576
    %v1902 = vrot.slane %v1901, 4
    %v1903 = vadd.f32 %v1901, %v1902
    %v1904 = vrot.slane %v1903, 2
    %v1905 = vadd.f32 %v1903, %v1904
    %v1906 = vrot.slane %v1905, 1
    %v1907 = vadd.f32 %v1905, %v1906
    %v1908 = vadd.f32 %v1577, %v1578
    %v1909 = vadd.f32 %v1908, %v1579
    %v1910 = vadd.f32 %v1909, %v1580
    %v1911 = vrot.slane %v1910, 4
    %v1912 = vadd.f32 %v1910, %v1911
    %v1913 = vrot.slane %v1912, 2
    %v1914 = vadd.f32 %v1912, %v1913
    %v1915 = vrot.slane %v1914, 1
    %v1916 = vadd.f32 %v1914, %v1915
    %v1917 = vadd.f32 %v1581, %v1582
    %v1918 = vadd.f32 %v1917, %v1583
    %v1919 = vadd.f32 %v1918, %v1584
    %v1920 = vrot.slane %v1919, 4
    %v1921 = vadd.f32 %v1919, %v1920
    %v1922 = vrot.slane %v1921, 2
    %v1923 = vadd.f32 %v1921, %v1922
    %v1924 = vrot.slane %v1923, 1
    %v1925 = vadd.f32 %v1923, %v1924
    %v1926 = vadd.f32 %v1585, %v1586
    %v1927 = vadd.f32 %v1926, %v1587
    %v1928 = vadd.f32 %v1927, %v1588
    %v1929 = vrot.slane %v1928, 4
    %v1930 = vadd.f32 %v1928, %v1929
    %v1931 = vrot.slane %v1930, 2
    %v1932 = vadd.f32 %v1930, %v1931
    %v1933 = vrot.slane %v1932, 1
    %v1934 = vadd.f32 %v1932, %v1933
    %v1935 = vadd.f32 %v1589, %v1590
    %v1936 = vadd.f32 %v1935, %v1591
    %v1937 = vadd.f32 %v1936, %v1592
    %v1938 = vrot.slane %v1937, 4
    %v1939 = vadd.f32 %v1937, %v1938
    %v1940 = vrot.slane %v1939, 2
    %v1941 = vadd.f32 %v1939, %v1940
    %v1942 = vrot.slane %v1941, 1
    %v1943 = vadd.f32 %v1941, %v1942
    %v1944 = vadd.f32 %v1593, %v1594
    %v1945 = vadd.f32 %v1944, %v1595
    %v1946 = vadd.f32 %v1945, %v1596
    %v1947 = vrot.slane %v1946, 4
    %v1948 = vadd.f32 %v1946, %v1947
    %v1949 = vrot.slane %v1948, 2
    %v1950 = vadd.f32 %v1948, %v1949
    %v1951 = vrot.slane %v1950, 1
    %v1952 = vadd.f32 %v1950, %v1951
    %v1953 = vadd.f32 %v1597, %v1598
    %v1954 = vadd.f32 %v1953, %v1599
    %v1955 = vadd.f32 %v1954, %v1600
    %v1956 = vrot.slane %v1955, 4
    %v1957 = vadd.f32 %v1955, %v1956
    %v1958 = vrot.slane %v1957, 2
    %v1959 = vadd.f32 %v1957, %v1958
    %v1960 = vrot.slane %v1959, 1
    %v1961 = vadd.f32 %v1959, %v1960
    %v1962 = vadd.f32 %v1601, %v1602
    %v1963 = vadd.f32 %v1962, %v1603
    %v1964 = vadd.f32 %v1963, %v1604
    %v1965 = vrot.slane %v1964, 4
    %v1966 = vadd.f32 %v1964, %v1965
    %v1967 = vrot.slane %v1966, 2
    %v1968 = vadd.f32 %v1966, %v1967
    %v1969 = vrot.slane %v1968, 1
    %v1970 = vadd.f32 %v1968, %v1969
    %v1971 = vadd.f32 %v1605, %v1606
    %v1972 = vadd.f32 %v1971, %v1607
    %v1973 = vadd.f32 %v1972, %v1608
    %v1974 = vrot.slane %v1973, 4
    %v1975 = vadd.f32 %v1973, %v1974
    %v1976 = vrot.slane %v1975, 2
    %v1977 = vadd.f32 %v1975, %v1976
    %v1978 = vrot.slane %v1977, 1
    %v1979 = vadd.f32 %v1977, %v1978
    %v1980 = vadd.f32 %v1609, %v1610
    %v1981 = vadd.f32 %v1980, %v1611
    %v1982 = vadd.f32 %v1981, %v1612
    %v1983 = vrot.slane %v1982, 4
    %v1984 = vadd.f32 %v1982, %v1983
    %v1985 = vrot.slane %v1984, 2
    %v1986 = vadd.f32 %v1984, %v1985
    %v1987 = vrot.slane %v1986, 1
    %v1988 = vadd.f32 %v1986, %v1987
    %v1989 = vadd.f32 %v1613, %v1614
    %v1990 = vadd.f32 %v1989, %v1615
    %v1991 = vadd.f32 %v1990, %v1616
    %v1992 = vrot.slane %v1991, 4
    %v1993 = vadd.f32 %v1991, %v1992
    %v1994 = vrot.slane %v1993, 2
    %v1995 = vadd.f32 %v1993, %v1994
    %v1996 = vrot.slane %v1995, 1
    %v1997 = vadd.f32 %v1995, %v1996
    %v1998 = vadd.f32 %v1617, %v1618
    %v1999 = vadd.f32 %v1998, %v1619
    %v2000 = vadd.f32 %v1999, %v1620
    %v2001 = vrot.slane %v2000, 4
    %v2002 = vadd.f32 %v2000, %v2001
    %v2003 = vrot.slane %v2002, 2
    %v2004 = vadd.f32 %v2002, %v2003
    %v2005 = vrot.slane %v2004, 1
    %v2006 = vadd.f32 %v2004, %v2005
    %v2007 = vadd.f32 %v1621, %v1622
    %v2008 = vadd.f32 %v2007, %v1623
    %v2009 = vadd.f32 %v2008, %v1624
    %v2010 = vrot.slane %v2009, 4
    %v2011 = vadd.f32 %v2009, %v2010
    %v2012 = vrot.slane %v2011, 2
    %v2013 = vadd.f32 %v2011, %v2012
    %v2014 = vrot.slane %v2013, 1
    %v2015 = vadd.f32 %v2013, %v2014
    %v2016 = vadd.f32 %v1625, %v1626
    %v2017 = vadd.f32 %v2016, %v1627
    %v2018 = vadd.f32 %v2017, %v1628
    %v2019 = vrot.slane %v2018, 4
    %v2020 = vadd.f32 %v2018, %v2019
    %v2021 = vrot.slane %v2020, 2
    %v2022 = vadd.f32 %v2020, %v2021
    %v2023 = vrot.slane %v2022, 1
    %v2024 = vadd.f32 %v2022, %v2023
    %v2025 = vadd.f32 %v1629, %v1630
    %v2026 = vadd.f32 %v2025, %v1631
    %v2027 = vadd.f32 %v2026, %v1632
    %v2028 = vrot.slane %v2027, 4
    %v2029 = vadd.f32 %v2027, %v2028
    %v2030 = vrot.slane %v2029, 2
    %v2031 = vadd.f32 %v2029, %v2030
    %v2032 = vrot.slane %v2031, 1
    %v2033 = vadd.f32 %v2031, %v2032
    %v2034 = vadd.f32 %v1633, %v1634
    %v2035 = vadd.f32 %v2034, %v1635
    %v2036 = vadd.f32 %v2035, %v1636
    %v2037 = vrot.slane %v2036, 4
    %v2038 = vadd.f32 %v2036, %v2037
    %v2039 = vrot.slane %v2038, 2
    %v2040 = vadd.f32 %v2038, %v2039
    %v2041 = vrot.slane %v2040, 1
    %v2042 = vadd.f32 %v2040, %v2041
    %v2043 = vadd.f32 %v1637, %v1638
    %v2044 = vadd.f32 %v2043, %v1639
    %v2045 = vadd.f32 %v2044, %v1640
    %v2046 = vrot.slane %v2045, 4
    %v2047 = vadd.f32 %v2045, %v2046
    %v2048 = vrot.slane %v2047, 2
    %v2049 = vadd.f32 %v2047, %v2048
    %v2050 = vrot.slane %v2049, 1
    %v2051 = vadd.f32 %v2049, %v2050
    %v2052 = vadd.f32 %v1641, %v1642
    %v2053 = vadd.f32 %v2052, %v1643
    %v2054 = vadd.f32 %v2053, %v1644
    %v2055 = vrot.slane %v2054, 4
    %v2056 = vadd.f32 %v2054, %v2055
    %v2057 = vrot.slane %v2056, 2
    %v2058 = vadd.f32 %v2056, %v2057
    %v2059 = vrot.slane %v2058, 1
    %v2060 = vadd.f32 %v2058, %v2059
    %v2061 = vadd.f32 %v1645, %v1646
    %v2062 = vadd.f32 %v2061, %v1647
    %v2063 = vadd.f32 %v2062, %v1648
    %v2064 = vrot.slane %v2063, 4
    %v2065 = vadd.f32 %v2063, %v2064
    %v2066 = vrot.slane %v2065, 2
    %v2067 = vadd.f32 %v2065, %v2066
    %v2068 = vrot.slane %v2067, 1
    %v2069 = vadd.f32 %v2067, %v2068
    %v2070 = vadd.f32 %v1649, %v1650
    %v2071 = vadd.f32 %v2070, %v1651
    %v2072 = vadd.f32 %v2071, %v1652
    %v2073 = vrot.slane %v2072, 4
    %v2074 = vadd.f32 %v2072, %v2073
    %v2075 = vrot.slane %v2074, 2
    %v2076 = vadd.f32 %v2074, %v2075
    %v2077 = vrot.slane %v2076, 1
    %v2078 = vadd.f32 %v2076, %v2077
    %v2079 = vadd.f32 %v1653, %v1654
    %v2080 = vadd.f32 %v2079, %v1655
    %v2081 = vadd.f32 %v2080, %v1656
    %v2082 = vrot.slane %v2081, 4
    %v2083 = vadd.f32 %v2081, %v2082
    %v2084 = vrot.slane %v2083, 2
    %v2085 = vadd.f32 %v2083, %v2084
    %v2086 = vrot.slane %v2085, 1
    %v2087 = vadd.f32 %v2085, %v2086
    %v2088 = vadd.f32 %v1657, %v1658
    %v2089 = vadd.f32 %v2088, %v1659
    %v2090 = vadd.f32 %v2089, %v1660
    %v2091 = vrot.slane %v2090, 4
    %v2092 = vadd.f32 %v2090, %v2091
    %v2093 = vrot.slane %v2092, 2
    %v2094 = vadd.f32 %v2092, %v2093
    %v2095 = vrot.slane %v2094, 1
    %v2096 = vadd.f32 %v2094, %v2095
    %v2097 = vadd.f32 %v1661, %v1662
    %v2098 = vadd.f32 %v2097, %v1663
    %v2099 = vadd.f32 %v2098, %v1664
    %v2100 = vrot.slane %v2099, 4
    %v2101 = vadd.f32 %v2099, %v2100
    %v2102 = vrot.slane %v2101, 2
    %v2103 = vadd.f32 %v2101, %v2102
    %v2104 = vrot.slane %v2103, 1
    %v2105 = vadd.f32 %v2103, %v2104
    %v2106 = vadd.f32 %v1665, %v1666
    %v2107 = vadd.f32 %v2106, %v1667
    %v2108 = vadd.f32 %v2107, %v1668
    %v2109 = vrot.slane %v2108, 4
    %v2110 = vadd.f32 %v2108, %v2109
    %v2111 = vrot.slane %v2110, 2
    %v2112 = vadd.f32 %v2110, %v2111
    %v2113 = vrot.slane %v2112, 1
    %v2114 = vadd.f32 %v2112, %v2113
    %v2115 = vadd.f32 %v1669, %v1670
    %v2116 = vadd.f32 %v2115, %v1671
    %v2117 = vadd.f32 %v2116, %v1672
    %v2118 = vrot.slane %v2117, 4
    %v2119 = vadd.f32 %v2117, %v2118
    %v2120 = vrot.slane %v2119, 2
    %v2121 = vadd.f32 %v2119, %v2120
    %v2122 = vrot.slane %v2121, 1
    %v2123 = vadd.f32 %v2121, %v2122
    %v2124 = vadd.f32 %v1673, %v1674
    %v2125 = vadd.f32 %v2124, %v1675
    %v2126 = vadd.f32 %v2125, %v1676
    %v2127 = vrot.slane %v2126, 4
    %v2128 = vadd.f32 %v2126, %v2127
    %v2129 = vrot.slane %v2128, 2
    %v2130 = vadd.f32 %v2128, %v2129
    %v2131 = vrot.slane %v2130, 1
    %v2132 = vadd.f32 %v2130, %v2131
    %v2133 = vadd.f32 %v1677, %v1678
    %v2134 = vadd.f32 %v2133, %v1679
    %v2135 = vadd.f32 %v2134, %v1680
    %v2136 = vrot.slane %v2135, 4
    %v2137 = vadd.f32 %v2135, %v2136
    %v2138 = vrot.slane %v2137, 2
    %v2139 = vadd.f32 %v2137, %v2138
    %v2140 = vrot.slane %v2139, 1
    %v2141 = vadd.f32 %v2139, %v2140
    %v2142 = vadd.f32 %v1681, %v1682
    %v2143 = vadd.f32 %v2142, %v1683
    %v2144 = vadd.f32 %v2143, %v1684
    %v2145 = vrot.slane %v2144, 4
    %v2146 = vadd.f32 %v2144, %v2145
    %v2147 = vrot.slane %v2146, 2
    %v2148 = vadd.f32 %v2146, %v2147
    %v2149 = vrot.slane %v2148, 1
    %v2150 = vadd.f32 %v2148, %v2149
    %v2151 = vadd.f32 %v1685, %v1686
    %v2152 = vadd.f32 %v2151, %v1687
    %v2153 = vadd.f32 %v2152, %v1688
    %v2154 = vrot.slane %v2153, 4
    %v2155 = vadd.f32 %v2153, %v2154
    %v2156 = vrot.slane %v2155, 2
    %v2157 = vadd.f32 %v2155, %v2156
    %v2158 = vrot.slane %v2157, 1
    %v2159 = vadd.f32 %v2157, %v2158
    %v2160 = vadd.f32 %v1689, %v1690
    %v2161 = vadd.f32 %v2160, %v1691
    %v2162 = vadd.f32 %v2161, %v1692
    %v2163 = vrot.slane %v2162, 4
    %v2164 = vadd.f32 %v2162, %v2163
    %v2165 = vrot.slane %v2164, 2
    %v2166 = vadd.f32 %v2164, %v2165
    %v2167 = vrot.slane %v2166, 1
    %v2168 = vadd.f32 %v2166, %v2167
    %v2169 = vadd.f32 %v1693, %v1694
    %v2170 = vadd.f32 %v2169, %v1695
    %v2171 = vadd.f32 %v2170, %v1696
    %v2172 = vrot.slane %v2171, 4
    %v2173 = vadd.f32 %v2171, %v2172
    %v2174 = vrot.slane %v2173, 2
    %v2175 = vadd.f32 %v2173, %v2174
    %v2176 = vrot.slane %v2175, 1
    %v2177 = vadd.f32 %v2175, %v2176
    %v2178 = vadd.f32 %v1697, %v1698
    %v2179 = vadd.f32 %v2178, %v1699
    %v2180 = vadd.f32 %v2179, %v1700
    %v2181 = vrot.slane %v2180, 4
    %v2182 = vadd.f32 %v2180, %v2181
    %v2183 = vrot.slane %v2182, 2
    %v2184 = vadd.f32 %v2182, %v2183
    %v2185 = vrot.slane %v2184, 1
    %v2186 = vadd.f32 %v2184, %v2185
    %v2187 = vadd.f32 %v1701, %v1702
    %v2188 = vadd.f32 %v2187, %v1703
    %v2189 = vadd.f32 %v2188, %v1704
    %v2190 = vrot.slane %v2189, 4
    %v2191 = vadd.f32 %v2189, %v2190
    %v2192 = vrot.slane %v2191, 2
    %v2193 = vadd.f32 %v2191, %v2192
    %v2194 = vrot.slane %v2193, 1
    %v2195 = vadd.f32 %v2193, %v2194
    %v2196 = vadd.f32 %v1705, %v1706
    %v2197 = vadd.f32 %v2196, %v1707
    %v2198 = vadd.f32 %v2197, %v1708
    %v2199 = vrot.slane %v2198, 4
    %v2200 = vadd.f32 %v2198, %v2199
    %v2201 = vrot.slane %v2200, 2
    %v2202 = vadd.f32 %v2200, %v2201
    %v2203 = vrot.slane %v2202, 1
    %v2204 = vadd.f32 %v2202, %v2203
    %v2205 = vadd.f32 %v1709, %v1710
    %v2206 = vadd.f32 %v2205, %v1711
    %v2207 = vadd.f32 %v2206, %v1712
    %v2208 = vrot.slane %v2207, 4
    %v2209 = vadd.f32 %v2207, %v2208
    %v2210 = vrot.slane %v2209, 2
    %v2211 = vadd.f32 %v2209, %v2210
    %v2212 = vrot.slane %v2211, 1
    %v2213 = vadd.f32 %v2211, %v2212
    %v2214 = vadd.f32 %v1713, %v1714
    %v2215 = vadd.f32 %v2214, %v1715
    %v2216 = vadd.f32 %v2215, %v1716
    %v2217 = vrot.slane %v2216, 4
    %v2218 = vadd.f32 %v2216, %v2217
    %v2219 = vrot.slane %v2218, 2
    %v2220 = vadd.f32 %v2218, %v2219
    %v2221 = vrot.slane %v2220, 1
    %v2222 = vadd.f32 %v2220, %v2221
    %v2223 = vadd.f32 %v1717, %v1718
    %v2224 = vadd.f32 %v2223, %v1719
    %v2225 = vadd.f32 %v2224, %v1720
    %v2226 = vrot.slane %v2225, 4
    %v2227 = vadd.f32 %v2225, %v2226
    %v2228 = vrot.slane %v2227, 2
    %v2229 = vadd.f32 %v2227, %v2228
    %v2230 = vrot.slane %v2229, 1
    %v2231 = vadd.f32 %v2229, %v2230
    %v2232 = vadd.f32 %v1721, %v1722
    %v2233 = vadd.f32 %v2232, %v1723
    %v2234 = vadd.f32 %v2233, %v1724
    %v2235 = vrot.slane %v2234, 4
    %v2236 = vadd.f32 %v2234, %v2235
    %v2237 = vrot.slane %v2236, 2
    %v2238 = vadd.f32 %v2236, %v2237
    %v2239 = vrot.slane %v2238, 1
    %v2240 = vadd.f32 %v2238, %v2239
    %v2241 = vadd.f32 %v1725, %v1726
    %v2242 = vadd.f32 %v2241, %v1727
    %v2243 = vadd.f32 %v2242, %v1728
    %v2244 = vrot.slane %v2243, 4
    %v2245 = vadd.f32 %v2243, %v2244
    %v2246 = vrot.slane %v2245, 2
    %v2247 = vadd.f32 %v2245, %v2246
    %v2248 = vrot.slane %v2247, 1
    %v2249 = vadd.f32 %v2247, %v2248
    %v2250 = vadd.f32 %v1729, %v1730
    %v2251 = vadd.f32 %v2250, %v1731
    %v2252 = vadd.f32 %v2251, %v1732
    %v2253 = vrot.slane %v2252, 4
    %v2254 = vadd.f32 %v2252, %v2253
    %v2255 = vrot.slane %v2254, 2
    %v2256 = vadd.f32 %v2254, %v2255
    %v2257 = vrot.slane %v2256, 1
    %v2258 = vadd.f32 %v2256, %v2257
    %v2259 = vadd.f32 %v1733, %v1734
    %v2260 = vadd.f32 %v2259, %v1735
    %v2261 = vadd.f32 %v2260, %v1736
    %v2262 = vrot.slane %v2261, 4
    %v2263 = vadd.f32 %v2261, %v2262
    %v2264 = vrot.slane %v2263, 2
    %v2265 = vadd.f32 %v2263, %v2264
    %v2266 = vrot.slane %v2265, 1
    %v2267 = vadd.f32 %v2265, %v2266
    %v2268 = vadd.f32 %v1737, %v1738
    %v2269 = vadd.f32 %v2268, %v1739
    %v2270 = vadd.f32 %v2269, %v1740
    %v2271 = vrot.slane %v2270, 4
    %v2272 = vadd.f32 %v2270, %v2271
    %v2273 = vrot.slane %v2272, 2
    %v2274 = vadd.f32 %v2272, %v2273
    %v2275 = vrot.slane %v2274, 1
    %v2276 = vadd.f32 %v2274, %v2275
    %v2277 = vadd.f32 %v1741, %v1742
    %v2278 = vadd.f32 %v2277, %v1743
    %v2279 = vadd.f32 %v2278, %v1744
    %v2280 = vrot.slane %v2279, 4
    %v2281 = vadd.f32 %v2279, %v2280
    %v2282 = vrot.slane %v2281, 2
    %v2283 = vadd.f32 %v2281, %v2282
    %v2284 = vrot.slane %v2283, 1
    %v2285 = vadd.f32 %v2283, %v2284
    %v2286 = vadd.f32 %v1745, %v1746
    %v2287 = vadd.f32 %v2286, %v1747
    %v2288 = vadd.f32 %v2287, %v1748
    %v2289 = vrot.slane %v2288, 4
    %v2290 = vadd.f32 %v2288, %v2289
    %v2291 = vrot.slane %v2290, 2
    %v2292 = vadd.f32 %v2290, %v2291
    %v2293 = vrot.slane %v2292, 1
    %v2294 = vadd.f32 %v2292, %v2293
    %v2295 = vadd.f32 %v1749, %v1750
    %v2296 = vadd.f32 %v2295, %v1751
    %v2297 = vadd.f32 %v2296, %v1752
    %v2298 = vrot.slane %v2297, 4
    %v2299 = vadd.f32 %v2297, %v2298
    %v2300 = vrot.slane %v2299, 2
    %v2301 = vadd.f32 %v2299, %v2300
    %v2302 = vrot.slane %v2301, 1
    %v2303 = vadd.f32 %v2301, %v2302
    %v2304 = vadd.f32 %v1753, %v1754
    %v2305 = vadd.f32 %v2304, %v1755
    %v2306 = vadd.f32 %v2305, %v1756
    %v2307 = vrot.slane %v2306, 4
    %v2308 = vadd.f32 %v2306, %v2307
    %v2309 = vrot.slane %v2308, 2
    %v2310 = vadd.f32 %v2308, %v2309
    %v2311 = vrot.slane %v2310, 1
    %v2312 = vadd.f32 %v2310, %v2311
    %v2313 = vadd.f32 %v1757, %v1758
    %v2314 = vadd.f32 %v2313, %v1759
    %v2315 = vadd.f32 %v2314, %v1760
    %v2316 = vrot.slane %v2315, 4
    %v2317 = vadd.f32 %v2315, %v2316
    %v2318 = vrot.slane %v2317, 2
    %v2319 = vadd.f32 %v2317, %v2318
    %v2320 = vrot.slane %v2319, 1
    %v2321 = vadd.f32 %v2319, %v2320
    %v2322 = vadd.f32 %v1761, %v1762
    %v2323 = vadd.f32 %v2322, %v1763
    %v2324 = vadd.f32 %v2323, %v1764
    %v2325 = vrot.slane %v2324, 4
    %v2326 = vadd.f32 %v2324, %v2325
    %v2327 = vrot.slane %v2326, 2
    %v2328 = vadd.f32 %v2326, %v2327
    %v2329 = vrot.slane %v2328, 1
    %v2330 = vadd.f32 %v2328, %v2329
    %v2331 = vadd.f32 %v1765, %v1766
    %v2332 = vadd.f32 %v2331, %v1767
    %v2333 = vadd.f32 %v2332, %v1768
    %v2334 = vrot.slane %v2333, 4
    %v2335 = vadd.f32 %v2333, %v2334
    %v2336 = vrot.slane %v2335, 2
    %v2337 = vadd.f32 %v2335, %v2336
    %v2338 = vrot.slane %v2337, 1
    %v2339 = vadd.f32 %v2337, %v2338
    %v2340 = vadd.f32 %v1769, %v1770
    %v2341 = vadd.f32 %v2340, %v1771
    %v2342 = vadd.f32 %v2341, %v1772
    %v2343 = vrot.slane %v2342, 4
    %v2344 = vadd.f32 %v2342, %v2343
    %v2345 = vrot.slane %v2344, 2
    %v2346 = vadd.f32 %v2344, %v2345
    %v2347 = vrot.slane %v2346, 1
    %v2348 = vadd.f32 %v2346, %v2347
    %v2357 = vrot.slane %v293, 1
    %v2358 = vrot.slane %v293, 2
    %v2359 = vrot.slane %v293, 3
    %v2360 = vrot.slane %v293, 4
    %v2361 = vrot.slane %v293, 5
    %v2362 = vrot.slane %v293, 6
    %v2363 = vrot.slane %v293, 7
    %v2364 = vrot.slane %v294, 1
    %v2365 = vrot.slane %v294, 2
    %v2366 = vrot.slane %v294, 3
    %v2367 = vrot.slane %v294, 4
    %v2368 = vrot.slane %v294, 5
    %v2369 = vrot.slane %v294, 6
    %v2370 = vrot.slane %v294, 7
    %v2371 = vrot.slane %v295, 1
    %v2372 = vrot.slane %v295, 2
    %v2373 = vrot.slane %v295, 3
    %v2374 = vrot.slane %v295, 4
    %v2375 = vrot.slane %v295, 5
    %v2376 = vrot.slane %v295, 6
    %v2377 = vrot.slane %v295, 7
    %v2378 = vrot.slane %v296, 1
    %v2379 = vrot.slane %v296, 2
    %v2380 = vrot.slane %v296, 3
    %v2381 = vrot.slane %v296, 4
    %v2382 = vrot.slane %v296, 5
    %v2383 = vrot.slane %v296, 6
    %v2384 = vrot.slane %v296, 7
    %v2385 = vrot.slane %v297, 1
    %v2386 = vrot.slane %v297, 2
    %v2387 = vrot.slane %v297, 3
    %v2388 = vrot.slane %v297, 4
    %v2389 = vrot.slane %v297, 5
    %v2390 = vrot.slane %v297, 6
    %v2391 = vrot.slane %v297, 7
    %v2392 = vrot.slane %v298, 1
    %v2393 = vrot.slane %v298, 2
    %v2394 = vrot.slane %v298, 3
    %v2395 = vrot.slane %v298, 4
    %v2396 = vrot.slane %v298, 5
    %v2397 = vrot.slane %v298, 6
    %v2398 = vrot.slane %v298, 7
    %v2399 = vrot.slane %v299, 1
    %v2400 = vrot.slane %v299, 2
    %v2401 = vrot.slane %v299, 3
    %v2402 = vrot.slane %v299, 4
    %v2403 = vrot.slane %v299, 5
    %v2404 = vrot.slane %v299, 6
    %v2405 = vrot.slane %v299, 7
    %v2406 = vrot.slane %v300, 1
    %v2407 = vrot.slane %v300, 2
    %v2408 = vrot.slane %v300, 3
    %v2409 = vrot.slane %v300, 4
    %v2410 = vrot.slane %v300, 5
    %v2411 = vrot.slane %v300, 6
    %v2412 = vrot.slane %v300, 7
    %v2477 = vadd.f32 %v1781, %v293
    %v2478 = vadd.f32 %v1790, %v2357
    %v2479 = vadd.f32 %v1799, %v2358
    %v2480 = vadd.f32 %v1808, %v2359
    %v2481 = vadd.f32 %v1817, %v2360
    %v2482 = vadd.f32 %v1826, %v2361
    %v2483 = vadd.f32 %v1835, %v2362
    %v2484 = vadd.f32 %v1844, %v2363
    %v2485 = vadd.f32 %v1853, %v294
    %v2486 = vadd.f32 %v1862, %v2364
    %v2487 = vadd.f32 %v1871, %v2365
    %v2488 = vadd.f32 %v1880, %v2366
    %v2489 = vadd.f32 %v1889, %v2367
    %v2490 = vadd.f32 %v1898, %v2368
    %v2491 = vadd.f32 %v1907, %v2369
    %v2492 = vadd.f32 %v1916, %v2370
    %v2493 = vadd.f32 %v1925, %v295
    %v2494 = vadd.f32 %v1934, %v2371
    %v2495 = vadd.f32 %v1943, %v2372
    %v2496 = vadd.f32 %v1952, %v2373
    %v2497 = vadd.f32 %v1961, %v2374
    %v2498 = vadd.f32 %v1970, %v2375
    %v2499 = vadd.f32 %v1979, %v2376
    %v2500 = vadd.f32 %v1988, %v2377
    %v2501 = vadd.f32 %v1997, %v296
    %v2502 = vadd.f32 %v2006, %v2378
    %v2503 = vadd.f32 %v2015, %v2379
    %v2504 = vadd.f32 %v2024, %v2380
    %v2505 = vadd.f32 %v2033, %v2381
    %v2506 = vadd.f32 %v2042, %v2382
    %v2507 = vadd.f32 %v2051, %v2383
    %v2508 = vadd.f32 %v2060, %v2384
    %v2509 = vadd.f32 %v2069, %v297
    %v2510 = vadd.f32 %v2078, %v2385
    %v2511 = vadd.f32 %v2087, %v2386
    %v2512 = vadd.f32 %v2096, %v2387
    %v2513 = vadd.f32 %v2105, %v2388
    %v2514 = vadd.f32 %v2114, %v2389
    %v2515 = vadd.f32 %v2123, %v2390
    %v2516 = vadd.f32 %v2132, %v2391
    %v2517 = vadd.f32 %v2141, %v298
    %v2518 = vadd.f32 %v2150, %v2392
    %v2519 = vadd.f32 %v2159, %v2393
    %v2520 = vadd.f32 %v2168, %v2394
    %v2521 = vadd.f32 %v2177, %v2395
    %v2522 = vadd.f32 %v2186, %v2396
    %v2523 = vadd.f32 %v2195, %v2397
    %v2524 = vadd.f32 %v2204, %v2398
    %v2525 = vadd.f32 %v2213, %v299
    %v2526 = vadd.f32 %v2222, %v2399
    %v2527 = vadd.f32 %v2231, %v2400
    %v2528 = vadd.f32 %v2240, %v2401
    %v2529 = vadd.f32 %v2249, %v2402
    %v2530 = vadd.f32 %v2258, %v2403
    %v2531 = vadd.f32 %v2267, %v2404
    %v2532 = vadd.f32 %v2276, %v2405
    %v2533 = vadd.f32 %v2285, %v300
    %v2534 = vadd.f32 %v2294, %v2406
    %v2535 = vadd.f32 %v2303, %v2407
    %v2536 = vadd.f32 %v2312, %v2408
    %v2537 = vadd.f32 %v2321, %v2409
    %v2538 = vadd.f32 %v2330, %v2410
    %v2539 = vadd.f32 %v2339, %v2411
    %v2540 = vadd.f32 %v2348, %v2412
    %v2605 = vrot.slane %v2478, 7
    %vm2606 = vcmask 1041409
    %v2607 = vsel %vm2606, %v2605, %v2477
    %v2608 = vrot.slane %v2479, 6
    %vm2609 = vcmask 1042434
    %v2610 = vsel %vm2609, %v2608, %v2607
    %v2611 = vrot.slane %v2480, 5
    %vm2612 = vcmask 1043459
    %v2613 = vsel %vm2612, %v2611, %v2610
    %v2614 = vrot.slane %v2481, 4
    %vm2615 = vcmask 1044484
    %v2616 = vsel %vm2615, %v2614, %v2613
    %v2617 = vrot.slane %v2482, 3
    %vm2618 = vcmask 1045509
    %v2619 = vsel %vm2618, %v2617, %v2616
    %v2620 = vrot.slane %v2483, 2
    %vm2621 = vcmask 1046534
    %v2622 = vsel %vm2621, %v2620, %v2619
    %v2623 = vrot.slane %v2484, 1
    %vm2624 = vcmask 1047559
    %v2625 = vsel %vm2624, %v2623, %v2622
    %v2626 = vrot.slane %v2486, 7
    %v2627 = vsel %vm2606, %v2626, %v2485
    %v2628 = vrot.slane %v2487, 6
    %v2629 = vsel %vm2609, %v2628, %v2627
    %v2630 = vrot.slane %v2488, 5
    %v2631 = vsel %vm2612, %v2630, %v2629
    %v2632 = vrot.slane %v2489, 4
    %v2633 = vsel %vm2615, %v2632, %v2631
    %v2634 = vrot.slane %v2490, 3
    %v2635 = vsel %vm2618, %v2634, %v2633
    %v2636 = vrot.slane %v2491, 2
    %v2637 = vsel %vm2621, %v2636, %v2635
    %v2638 = vrot.slane %v2492, 1
    %v2639 = vsel %vm2624, %v2638, %v2637
    %v2640 = vrot.slane %v2494, 7
    %v2641 = vsel %vm2606, %v2640, %v2493
    %v2642 = vrot.slane %v2495, 6
    %v2643 = vsel %vm2609, %v2642, %v2641
    %v2644 = vrot.slane %v2496, 5
    %v2645 = vsel %vm2612, %v2644, %v2643
    %v2646 = vrot.slane %v2497, 4
    %v2647 = vsel %vm2615, %v2646, %v2645
    %v2648 = vrot.slane %v2498, 3
    %v2649 = vsel %vm2618, %v2648, %v2647
    %v2650 = vrot.slane %v2499, 2
    %v2651 = vsel %vm2621, %v2650, %v2649
    %v2652 = vrot.slane %v2500, 1
    %v2653 = vsel %vm2624, %v2652, %v2651
    %v2654 = vrot.slane %v2502, 7
    %v2655 = vsel %vm2606, %v2654, %v2501
    %v2656 = vrot.slane %v2503, 6
    %v2657 = vsel %vm2609, %v2656, %v2655
    %v2658 = vrot.slane %v2504, 5
    %v2659 = vsel %vm2612, %v2658, %v2657
    %v2660 = vrot.slane %v2505, 4
    %v2661 = vsel %vm2615, %v2660, %v2659
    %v2662 = vrot.slane %v2506, 3
    %v2663 = vsel %vm2618, %v2662, %v2661
    %v2664 = vrot.slane %v2507, 2
    %v2665 = vsel %vm2621, %v2664, %v2663
    %v2666 = vrot.slane %v2508, 1
    %v2667 = vsel %vm2624, %v2666, %v2665
    %v2668 = vrot.slane %v2510, 7
    %v2669 = vsel %vm2606, %v2668, %v2509
    %v2670 = vrot.slane %v2511, 6
    %v2671 = vsel %vm2609, %v2670, %v2669
    %v2672 = vrot.slane %v2512, 5
    %v2673 = vsel %vm2612, %v2672, %v2671
    %v2674 = vrot.slane %v2513, 4
    %v2675 = vsel %vm2615, %v2674, %v2673
    %v2676 = vrot.slane %v2514, 3
    %v2677 = vsel %vm2618, %v2676, %v2675
    %v2678 = vrot.slane %v2515, 2
    %v2679 = vsel %vm2621, %v2678, %v2677
    %v2680 = vrot.slane %v2516, 1
    %v2681 = vsel %vm2624, %v2680, %v2679
    %v2682 = vrot.slane %v2518, 7
    %v2683 = vsel %vm2606, %v2682, %v2517
    %v2684 = vrot.slane %v2519, 6
    %v2685 = vsel %vm2609, %v2684, %v2683
    %v2686 = vrot.slane %v2520, 5
    %v2687 = vsel %vm2612, %v2686, %v2685
    %v2688 = vrot.slane %v2521, 4
    %v2689 = vsel %vm2615, %v2688, %v2687
    %v2690 = vrot.slane %v2522, 3
    %v2691 = vsel %vm2618, %v2690, %v2689
    %v2692 = vrot.slane %v2523, 2
    %v2693 = vsel %vm2621, %v2692, %v2691
    %v2694 = vrot.slane %v2524, 1
    %v2695 = vsel %vm2624, %v2694, %v2693
    %v2696 = vrot.slane %v2526, 7
    %v2697 = vsel %vm2606, %v2696, %v2525
    %v2698 = vrot.slane %v2527, 6
    %v2699 = vsel %vm2609, %v2698, %v2697
    %v2700 = vrot.slane %v2528, 5
    %v2701 = vsel %vm2612, %v2700, %v2699
    %v2702 = vrot.slane %v2529, 4
    %v2703 = vsel %vm2615, %v2702, %v2701
    %v2704 = vrot.slane %v2530, 3
    %v2705 = vsel %vm2618, %v2704, %v2703
    %v2706 = vrot.slane %v2531, 2
    %v2707 = vsel %vm2621, %v2706, %v2705
    %v2708 = vrot.slane %v2532, 1
    %v2709 = vsel %vm2624, %v2708, %v2707
    %v2710 = vrot.slane %v2534, 7
    %v2711 = vsel %vm2606, %v2710, %v2533
    %v2712 = vrot.slane %v2535, 6
    %v2713 = vsel %vm2609, %v2712, %v2711
    %v2714 = vrot.slane %v2536, 5
    %v2715 = vsel %vm2612, %v2714, %v2713
    %v2716 = vrot.slane %v2537, 4
    %v2717 = vsel %vm2615, %v2716, %v2715
    %v2718 = vrot.slane %v2538, 3
    %v2719 = vsel %vm2618, %v2718, %v2717
    %v2720 = vrot.slane %v2539, 2
    %v2721 = vsel %vm2621, %v2720, %v2719
    %v2722 = vrot.slane %v2540, 1
    %v2723 = vsel %vm2624, %v2722, %v2721
    %2732 = vst [vmem:[#allocation5] sm:$0xff] %v2625
    %2733 = vst [vmem:[#allocation5 + $0x8] sm:$0xff] %v2639
    %2734 = vst [vmem:[#allocation5 + $0x10] sm:$0xff] %v2653
    %2735 = vst [vmem:[#allocation5 + $0x18] sm:$0xff] %v2667
    %2736 = vst [vmem:[#allocation5 + $0x20] sm:$0xff] %v2681
    %2737 = vst [vmem:[#allocation5 + $0x28] sm:$0xff] %v2695
    %2738 = vst [vmem:[#allocation5 + $0x30] sm:$0xff] %v2709
    %2739 = vst [vmem:[#allocation5 + $0x38] sm:$0xff] %v2723
    // Predicated region
    $region18: #{tpu_custom_call.1} parent=1 // pred_check
      _
    $region19: #{tpu_custom_call.1} parent=1 // pred_check_branch
      %2741 = sbr.rel (0) target = $region21
    $region20: #{tpu_custom_call.1} parent=1 // pred_region
      %s2743 = ssub.s32 1024, 1024
      %2744 = vsyncadd [#allocation4], %s2743
      %s2745 = sshll.u32 [#allocation5], 4
      %s2746 = int_to_ptr.vmem [resolvable:$true] %s2745
      %2751 = dma.vmem_to_hbm [thread:$0]  %s2746, 1024, %s3, [#allocation4], 128, 128, 8
    $region21: #{tpu_custom_call.1} parent=1 // pred_fallthru
      _
    // Predicated region
    $region22: #{tpu_custom_call.1} parent=1 // pred_check
      _
    $region23: #{tpu_custom_call.1} parent=1 // pred_check_branch
      %2753 = sbr.rel (0) target = $region25
    $region24: #{tpu_custom_call.1} parent=1 // pred_region
      %2754 = dma.done [#allocation4], 1024
    $region25: #{tpu_custom_call.1} parent=1 // pred_fallthru
      _
    %2755 = vsyncpa [#allocation3], 1
    %2756 = vsyncpa [#allocation4], 1

</llo_original>
